<compile_context>
chip_gen: v7x
topology: tpu7x:2x2x1
jax: 0.10.0
libtpu: 0.0.40
codegen_flags: <defaults>
</compile_context>

<pallas_src>
import functools

import jax
import jax.numpy as jnp
import numpy as np
from jax import lax
from jax.experimental import pallas as pl
from jax.experimental.pallas import tpu as pltpu


def _round_up(x, m):
    return ((x + m - 1) // m) * m


def _tlstm3_kernel(pre_ref, wh_ref, h_ref, c_ref, *,
                   hid_p, t_block, seq_len, needs_mask, unroll):
    """One grid step = t_block timesteps of the pure h/c recurrence.

    pre_ref : (t_block, bat_blk, 5*H)  precomputed x-side gate terms,
              gate order [i, c, t1, t2, o]; t1/t2 are ALREADY sigmoided.
    wh_ref  : (H, 3*H)                 fused h-side weights [i, c, o]
    h_ref   : (bat_blk, H)             recurrent hidden (kernel output)
    c_ref   : (bat_blk, H)             recurrent cell (VMEM scratch)
    """
    tb = pl.program_id(1)
    H = hid_p

    @pl.when(tb == 0)
    def _():
        h_ref[...] = jnp.zeros_like(h_ref)
        c_ref[...] = jnp.zeros_like(c_ref)

    wh = wh_ref[...]  # hoist weight load out of the time loop

    def step(t, carry):
        h, c = carry
        pre = pre_ref[t]                                   # (bat_blk, 5*H)

        # The only matmul left on the serial critical path.
        pre_h = jnp.dot(h, wh, preferred_element_type=jnp.float32)  # (bat,3H)

        # All slices are 128-lane aligned (H % 128 == 0) -> free views.
        gate_i = jax.nn.sigmoid(pre[:, 0 * H:1 * H] + pre_h[:, 0 * H:1 * H])
        cont_c = jnp.tanh(pre[:, 1 * H:2 * H] + pre_h[:, 1 * H:2 * H])
        gate_t1 = pre[:, 2 * H:3 * H]                      # sigmoided in wrapper
        gate_t2 = pre[:, 3 * H:4 * H]                      # sigmoided in wrapper
        gate_o = jax.nn.sigmoid(pre[:, 4 * H:5 * H] + pre_h[:, 2 * H:3 * H])

        it1 = gate_i * gate_t1
        c_mix = (1.0 - it1) * c + it1 * cont_c
        c_new = (1.0 - gate_i) * c + gate_i * gate_t2 * cont_c
        h_new = gate_o * jnp.tanh(c_mix)

        if needs_mask:  # only traced when seq is padded to a multiple of t_block
            valid = (tb * t_block + t) < seq_len
            h_new = jnp.where(valid, h_new, h)
            c_new = jnp.where(valid, c_new, c)
        return h_new, c_new

    h_f, c_f = lax.fori_loop(0, t_block, step, (h_ref[...], c_ref[...]),
                             unroll=unroll)
    h_ref[...] = h_f
    c_ref[...] = c_f


def tlstm3_forward(x, params, *, t_block=None, bat_block=None):
    """x: (batch, seq, in_dim) float32 -> final hidden state (batch, hid_dim)."""
    bat, seq, in_dim = x.shape
    hid = params["b_i"].shape[0]
    tvec = params["b_pd"].shape[0]

    # Lane-align every gate block: pad hid up to a multiple of 128.
    H = _round_up(hid, 128)

    if bat_block is None:
        # Sublane-aligned batch tile.  On v7x pass bat_block <= bat/2 (multiple
        # of 8) so the "parallel" axis has >=2 blocks and both TCs get work.
        bat_block = min(_round_up(bat, 8), 256)
    bat_block = _round_up(bat_block, 8)
    bat_pad = _round_up(max(bat, bat_block), bat_block)
    n_bb = bat_pad // bat_block

    if t_block is None:
        # Keep the double-buffered pre_x tile around ~4 MiB so the working set
        # fits comfortably even under v7x's 64 MiB per-TC VMEM.
        budget_steps = max(1, (4 * 2 ** 20) // (bat_block * 5 * H * 4))
        t_block = max(1, min(seq, 128, max(8, budget_steps)))
    t_block = max(1, min(t_block, seq))

    n_tb = pl.cdiv(seq, t_block)
    seq_pad = n_tb * t_block
    needs_mask = seq_pad != seq

    W_i, W_c, W_o = params["W_i"], params["W_c"], params["W_o"]
    W_t1, W_t2 = params["W_t1"], params["W_t2"]

    # ---- Everything that does not depend on h is computed here (XLA) at full
    # MXU/EUP rate; the kernel's serial loop carries only h @ Wh. ----
    x_tm = jnp.transpose(x, (1, 0, 2)).astype(jnp.float32)        # (seq, bat, in)

    ts = (seq - jnp.arange(seq, dtype=jnp.float32))[:, None]      # (seq, 1)
    t_non = ts @ params["w_np"] + params["b_np"]                  # (seq, 1)
    t_pd = jnp.sin(ts @ params["w_pd"] + params["b_pd"])          # (seq, tvec)

    def x_proj(W, b):                                             # (seq, bat, hid)
        return jnp.einsum('sbi,ih->sbh', x_tm, W[:in_dim]) + b

    def t_bias(W):                                                # (seq, 1, hid)
        return (t_non * W[in_dim:in_dim + 1]
                + t_pd @ W[in_dim + 1:in_dim + 1 + tvec])[:, None, :]

    pre_i = x_proj(W_i, params["b_i"])
    pre_c = x_proj(W_c, params["b_c"])
    gate_t1 = jax.nn.sigmoid(x_proj(W_t1, params["b_t1"]) + t_bias(W_t1))
    gate_t2 = jax.nn.sigmoid(x_proj(W_t2, params["b_t2"]) + t_bias(W_t2))
    pre_o = x_proj(W_o, params["b_o"]) + t_bias(W_o)

    def pad_lanes(a):                                             # pad gate lanes
        return jnp.pad(a, ((0, 0), (0, 0), (0, H - hid)))

    pre_all = jnp.concatenate(
        [pad_lanes(pre_i), pad_lanes(pre_c),
         pad_lanes(gate_t1), pad_lanes(gate_t2),
         pad_lanes(pre_o)], axis=-1)                              # (seq, bat, 5H)
    pre_all = jnp.pad(
        pre_all, ((0, seq_pad - seq), (0, bat_pad - bat), (0, 0)))

    # Fused h-side weights, zero-padded to (H, 3H) so padded h lanes never
    # contribute to real lanes (and padded lanes stay finite -> no NaN/Inf).
    def pad_hh(w):                                                # (hid,hid)->(H,H)
        return jnp.pad(w, ((0, H - hid), (0, H - hid)))

    wh = jnp.concatenate(
        [pad_hh(W_i[in_dim:]), pad_hh(W_c[in_dim:]),
         pad_hh(W_o[in_dim + 1 + tvec:])], axis=-1)               # (H, 3H)

    unroll = int(min(t_block, 8))
    kernel = functools.partial(
        _tlstm3_kernel, hid_p=H, t_block=t_block, seq_len=seq,
        needs_mask=needs_mask, unroll=unroll)

    est_vmem = (2 * t_block * bat_block * 5 * H * 4    # pre_x (double-buffered)
                + 2 * H * 3 * H * 4                    # wh    (double-buffered)
                + 3 * bat_block * H * 4)               # h out (2 buf) + c scratch
    vmem_limit = int(min(100 * 2 ** 20, max(32 * 2 ** 20, 2 * est_vmem)))

    out = pl.pallas_call(
        kernel,
        out_shape=jax.ShapeDtypeStruct((bat_pad, H), jnp.float32),
        grid_spec=pltpu.PrefetchScalarGridSpec(
            num_scalar_prefetch=0,
            grid=(n_bb, n_tb),                         # (batch blocks, time blocks)
            in_specs=[
                pl.BlockSpec((t_block, bat_block, 5 * H), lambda b, s: (s, b, 0)),
                pl.BlockSpec((H, 3 * H), lambda b, s: (0, 0)),
            ],
            out_specs=pl.BlockSpec((bat_block, H), lambda b, s: (b, 0)),
            scratch_shapes=[pltpu.VMEM((bat_block, H), jnp.float32)],
        ),
        compiler_params=pltpu.CompilerParams(
            dimension_semantics=("parallel", "arbitrary"),
            vmem_limit_bytes=vmem_limit),
    )(pre_all, wh)
    return out[:bat, :hid]


def init_params(key, in_dim, hid, tvec):
    """Deterministic synthetic init matching torch.nn.Linear shapes.
    Weights stored in (fan_in, fan_out) convention, i.e. already transposed."""
    def linear(k, fan_in, fan_out):
        k1, k2 = jax.random.split(k)
        bound = fan_in ** -0.5
        W = jax.random.uniform(k1, (fan_in, fan_out), jnp.float32, -bound, bound)
        b = jax.random.uniform(k2, (fan_out,), jnp.float32, -bound, bound)
        return W, b

    keys = jax.random.split(key, 7)
    W_i, b_i = linear(keys[0], in_dim + hid, hid)               # fc_gate_i
    W_c, b_c = linear(keys[1], in_dim + hid, hid)               # fc_content_c_
    W_o, b_o = linear(keys[2], in_dim + hid + tvec + 1, hid)    # fc_gate_o
    W_t1, b_t1 = linear(keys[3], in_dim + tvec + 1, hid)        # fc_gate_t1
    W_t2, b_t2 = linear(keys[4], in_dim + tvec + 1, hid)        # fc_gate_t2
    w_np, b_np = linear(keys[5], 1, 1)                          # emb_t_non_pd
    w_pd, b_pd = linear(keys[6], 1, tvec)                       # emb_t_pd
    return dict(W_i=W_i, b_i=b_i, W_c=W_c, b_c=b_c, W_o=W_o, b_o=b_o,
                W_t1=W_t1, b_t1=b_t1, W_t2=W_t2, b_t2=b_t2,
                w_np=w_np, b_np=b_np, w_pd=w_pd, b_pd=b_pd)


def tlstm3_reference(x, params):
    """Pure-JAX mirror of the PyTorch forward, used as a correctness check."""
    bat, seq, _ = x.shape
    hid = params["b_i"].shape[0]
    sigmoid = jax.nn.sigmoid
    h = jnp.zeros((bat, hid), jnp.float32)
    c = jnp.zeros((bat, hid), jnp.float32)
    for j in range(seq):
        x_j = x[:, j]
        t_ = jnp.full((bat, 1), float(seq - j), jnp.float32)
        t_j = jnp.concatenate(
            [t_ @ params["w_np"] + params["b_np"],
             jnp.sin(t_ @ params["w_pd"] + params["b_pd"])], axis=-1)
        xt = jnp.concatenate([x_j, t_j], axis=-1)
        gate_t1 = sigmoid(xt @ params["W_t1"] + params["b_t1"])
        gate_t2 = sigmoid(xt @ params["W_t2"] + params["b_t2"])
        xh = jnp.concatenate([x_j, h], axis=-1)
        gate_i = sigmoid(xh @ params["W_i"] + params["b_i"])
        content_c_ = jnp.tanh(xh @ params["W_c"] + params["b_c"])
        content_c__ = (1 - gate_i * gate_t1) * c + gate_i * gate_t1 * content_c_
        c = (1 - gate_i) * c + gate_i * gate_t2 * content_c_
        xth = jnp.concatenate([x_j, t_j, h], axis=-1)
        gate_o = sigmoid(xth @ params["W_o"] + params["b_o"])
        h = gate_o * jnp.tanh(content_c__)
    return h


if __name__ == "__main__":
    bat, seq, in_dim = 2, 8, 8
    hid, tvec = 32, 16

    key = jax.random.PRNGKey(0)
    k_x, k_p = jax.random.split(key)
    x = jax.random.normal(k_x, (bat, seq, in_dim), jnp.float32)
    params = init_params(k_p, in_dim, hid, tvec)

    h_kernel = jax.block_until_ready(tlstm3_forward(x, params))
    h_ref = jax.block_until_ready(tlstm3_reference(x, params))

    assert h_kernel.shape == (bat, hid)
    np.testing.assert_allclose(np.asarray(h_kernel), np.asarray(h_ref),
                               rtol=1e-5, atol=1e-5)
    print("KERNEL_OK")
</pallas_src>

<mosaic_0001>
module attributes {stable_mosaic.version = 11 : i64} {
  func.func @_tlstm3_kernel(%arg0: i32, %arg1: i32, %arg2: memref<8x8x640xf32, #tpu.memory_space<vmem>>, %arg3: memref<128x384xf32, #tpu.memory_space<vmem>>, %arg4: memref<8x128xf32, #tpu.memory_space<vmem>>, %arg5: memref<8x128xf32, #tpu.memory_space<vmem>>) attributes {dimension_semantics = [#tpu.dimension_semantics<parallel>, #tpu.dimension_semantics<arbitrary>], iteration_bounds = array<i64: 1, 1>, scalar_prefetch = 0 : i64, scratch_operands = 1 : i64, tpu.core_type = #tpu.core_type<tc>, window_params = [{transform_indices = @transform_0, window_bounds = array<i64: 8, 8, 640>}, {pipeline_mode = #tpu.pipeline_mode<synchronous>, transform_indices = @transform_1, window_bounds = array<i64: 128, 384>}, {transform_indices = @transform_2, window_bounds = array<i64: 8, 128>}]} {
    %c0_i32 = arith.constant 0 : i32
    %0 = arith.cmpi eq, %arg1, %c0_i32 : i32
    %1 = arith.extui %0 : i1 to i32
    %c0_i32_0 = arith.constant 0 : i32
    %2 = arith.cmpi ne, %1, %c0_i32_0 : i32
    scf.if %2 {
      %cst_66 = arith.constant 0.000000e+00 : f32
      %328 = vector.broadcast %cst_66 : f32 to vector<8x128xf32>
      %c0_67 = arith.constant 0 : index
      %c0_68 = arith.constant 0 : index
      %329 = vector.load %arg4[%c0_67, %c0_68] : memref<8x128xf32, #tpu.memory_space<vmem>>, vector<8x128xf32>
      tpu.vector_store %arg4[%c0_67, %c0_68], %328 {strides = array<i32>} : memref<8x128xf32, #tpu.memory_space<vmem>>, vector<8x128xf32>,
      %cst_69 = arith.constant 0.000000e+00 : f32
      %330 = vector.broadcast %cst_69 : f32 to vector<8x128xf32>
      %c0_70 = arith.constant 0 : index
      %c0_71 = arith.constant 0 : index
      %331 = vector.load %arg5[%c0_70, %c0_71] : memref<8x128xf32, #tpu.memory_space<vmem>>, vector<8x128xf32>
      tpu.vector_store %arg5[%c0_70, %c0_71], %330 {strides = array<i32>} : memref<8x128xf32, #tpu.memory_space<vmem>>, vector<8x128xf32>,
    } else {
    }
    %c0 = arith.constant 0 : index
    %c0_1 = arith.constant 0 : index
    %3 = vector.load %arg3[%c0, %c0_1] : memref<128x384xf32, #tpu.memory_space<vmem>>, vector<128x384xf32>
    %c0_2 = arith.constant 0 : index
    %c0_3 = arith.constant 0 : index
    %4 = vector.load %arg4[%c0_2, %c0_3] : memref<8x128xf32, #tpu.memory_space<vmem>>, vector<8x128xf32>
    %c0_4 = arith.constant 0 : index
    %c0_5 = arith.constant 0 : index
    %5 = vector.load %arg5[%c0_4, %c0_5] : memref<8x128xf32, #tpu.memory_space<vmem>>, vector<8x128xf32>
    %c0_i32_6 = arith.constant 0 : i32
    %6 = arith.index_cast %c0_i32_6 : i32 to index
    %c0_7 = arith.constant 0 : index
    %c0_8 = arith.constant 0 : index
    %7 = vector.load %arg2[%6, %c0_7, %c0_8] : memref<8x8x640xf32, #tpu.memory_space<vmem>>, vector<1x8x640xf32>
    %8 = vector.shape_cast %7 : vector<1x8x640xf32> to vector<8x640xf32>
    %cst = arith.constant dense<0.000000e+00> : vector<8x384xf32>
    %9 = tpu.matmul %4, %3, %cst {dimension_numbers = #tpu.dot_dimension_numbers<[1], [0], [0], [1], [0, 0, 1, 1], [], []>} : vector<8x128xf32>, vector<128x384xf32>, vector<8x384xf32> -> vector<8x384xf32>
    %10 = vector.extract_strided_slice %8 {offsets = [0, 0], sizes = [8, 128], strides = [1, 1]} : vector<8x640xf32> to vector<8x128xf32>
    %11 = vector.extract_strided_slice %9 {offsets = [0, 0], sizes = [8, 128], strides = [1, 1]} : vector<8x384xf32> to vector<8x128xf32>
    %12 = arith.addf %10, %11 : vector<8x128xf32>
    %13 = arith.negf %12 : vector<8x128xf32>
    %14 = math.exp %13 : vector<8x128xf32>
    %cst_9 = arith.constant 1.000000e+00 : f32
    %15 = vector.broadcast %cst_9 : f32 to vector<8x128xf32>
    %16 = arith.addf %15, %14 : vector<8x128xf32>
    %17 = arith.divf %15, %16 : vector<8x128xf32>
    %18 = vector.extract_strided_slice %8 {offsets = [0, 128], sizes = [8, 128], strides = [1, 1]} : vector<8x640xf32> to vector<8x128xf32>
    %19 = vector.extract_strided_slice %9 {offsets = [0, 128], sizes = [8, 128], strides = [1, 1]} : vector<8x384xf32> to vector<8x128xf32>
    %20 = arith.addf %18, %19 : vector<8x128xf32>
    %21 = math.tanh %20 : vector<8x128xf32>
    %22 = vector.extract_strided_slice %8 {offsets = [0, 256], sizes = [8, 128], strides = [1, 1]} : vector<8x640xf32> to vector<8x128xf32>
    %23 = vector.extract_strided_slice %8 {offsets = [0, 384], sizes = [8, 128], strides = [1, 1]} : vector<8x640xf32> to vector<8x128xf32>
    %24 = vector.extract_strided_slice %8 {offsets = [0, 512], sizes = [8, 128], strides = [1, 1]} : vector<8x640xf32> to vector<8x128xf32>
    %25 = vector.extract_strided_slice %9 {offsets = [0, 256], sizes = [8, 128], strides = [1, 1]} : vector<8x384xf32> to vector<8x128xf32>
    %26 = arith.addf %24, %25 : vector<8x128xf32>
    %27 = arith.negf %26 : vector<8x128xf32>
    %28 = math.exp %27 : vector<8x128xf32>
    %cst_10 = arith.constant 1.000000e+00 : f32
    %29 = vector.broadcast %cst_10 : f32 to vector<8x128xf32>
    %30 = arith.addf %29, %28 : vector<8x128xf32>
    %31 = arith.divf %29, %30 : vector<8x128xf32>
    %32 = arith.mulf %17, %22 : vector<8x128xf32>
    %cst_11 = arith.constant 1.000000e+00 : f32
    %33 = vector.broadcast %cst_11 : f32 to vector<8x128xf32>
    %34 = arith.subf %33, %32 : vector<8x128xf32>
    %35 = arith.mulf %34, %5 : vector<8x128xf32>
    %36 = arith.mulf %32, %21 : vector<8x128xf32>
    %37 = arith.addf %35, %36 : vector<8x128xf32>
    %cst_12 = arith.constant 1.000000e+00 : f32
    %38 = vector.broadcast %cst_12 : f32 to vector<8x128xf32>
    %39 = arith.subf %38, %17 : vector<8x128xf32>
    %40 = arith.mulf %39, %5 : vector<8x128xf32>
    %41 = arith.mulf %17, %23 : vector<8x128xf32>
    %42 = arith.mulf %41, %21 : vector<8x128xf32>
    %43 = arith.addf %40, %42 : vector<8x128xf32>
    %44 = math.tanh %37 : vector<8x128xf32>
    %45 = arith.mulf %31, %44 : vector<8x128xf32>
    %c1_i32 = arith.constant 1 : i32
    %46 = arith.index_cast %c1_i32 : i32 to index
    %c0_13 = arith.constant 0 : index
    %c0_14 = arith.constant 0 : index
    %47 = vector.load %arg2[%46, %c0_13, %c0_14] : memref<8x8x640xf32, #tpu.memory_space<vmem>>, vector<1x8x640xf32>
    %48 = vector.shape_cast %47 : vector<1x8x640xf32> to vector<8x640xf32>
    %cst_15 = arith.constant dense<0.000000e+00> : vector<8x384xf32>
    %49 = tpu.matmul %45, %3, %cst_15 {dimension_numbers = #tpu.dot_dimension_numbers<[1], [0], [0], [1], [0, 0, 1, 1], [], []>} : vector<8x128xf32>, vector<128x384xf32>, vector<8x384xf32> -> vector<8x384xf32>
    %50 = vector.extract_strided_slice %48 {offsets = [0, 0], sizes = [8, 128], strides = [1, 1]} : vector<8x640xf32> to vector<8x128xf32>
    %51 = vector.extract_strided_slice %49 {offsets = [0, 0], sizes = [8, 128], strides = [1, 1]} : vector<8x384xf32> to vector<8x128xf32>
    %52 = arith.addf %50, %51 : vector<8x128xf32>
    %53 = arith.negf %52 : vector<8x128xf32>
    %54 = math.exp %53 : vector<8x128xf32>
    %cst_16 = arith.constant 1.000000e+00 : f32
    %55 = vector.broadcast %cst_16 : f32 to vector<8x128xf32>
    %56 = arith.addf %55, %54 : vector<8x128xf32>
    %57 = arith.divf %55, %56 : vector<8x128xf32>
    %58 = vector.extract_strided_slice %48 {offsets = [0, 128], sizes = [8, 128], strides = [1, 1]} : vector<8x640xf32> to vector<8x128xf32>
    %59 = vector.extract_strided_slice %49 {offsets = [0, 128], sizes = [8, 128], strides = [1, 1]} : vector<8x384xf32> to vector<8x128xf32>
    %60 = arith.addf %58, %59 : vector<8x128xf32>
    %61 = math.tanh %60 : vector<8x128xf32>
    %62 = vector.extract_strided_slice %48 {offsets = [0, 256], sizes = [8, 128], strides = [1, 1]} : vector<8x640xf32> to vector<8x128xf32>
    %63 = vector.extract_strided_slice %48 {offsets = [0, 384], sizes = [8, 128], strides = [1, 1]} : vector<8x640xf32> to vector<8x128xf32>
    %64 = vector.extract_strided_slice %48 {offsets = [0, 512], sizes = [8, 128], strides = [1, 1]} : vector<8x640xf32> to vector<8x128xf32>
    %65 = vector.extract_strided_slice %49 {offsets = [0, 256], sizes = [8, 128], strides = [1, 1]} : vector<8x384xf32> to vector<8x128xf32>
    %66 = arith.addf %64, %65 : vector<8x128xf32>
    %67 = arith.negf %66 : vector<8x128xf32>
    %68 = math.exp %67 : vector<8x128xf32>
    %cst_17 = arith.constant 1.000000e+00 : f32
    %69 = vector.broadcast %cst_17 : f32 to vector<8x128xf32>
    %70 = arith.addf %69, %68 : vector<8x128xf32>
    %71 = arith.divf %69, %70 : vector<8x128xf32>
    %72 = arith.mulf %57, %62 : vector<8x128xf32>
    %cst_18 = arith.constant 1.000000e+00 : f32
    %73 = vector.broadcast %cst_18 : f32 to vector<8x128xf32>
    %74 = arith.subf %73, %72 : vector<8x128xf32>
    %75 = arith.mulf %74, %43 : vector<8x128xf32>
    %76 = arith.mulf %72, %61 : vector<8x128xf32>
    %77 = arith.addf %75, %76 : vector<8x128xf32>
    %cst_19 = arith.constant 1.000000e+00 : f32
    %78 = vector.broadcast %cst_19 : f32 to vector<8x128xf32>
    %79 = arith.subf %78, %57 : vector<8x128xf32>
    %80 = arith.mulf %79, %43 : vector<8x128xf32>
    %81 = arith.mulf %57, %63 : vector<8x128xf32>
    %82 = arith.mulf %81, %61 : vector<8x128xf32>
    %83 = arith.addf %80, %82 : vector<8x128xf32>
    %84 = math.tanh %77 : vector<8x128xf32>
    %85 = arith.mulf %71, %84 : vector<8x128xf32>
    %c2_i32 = arith.constant 2 : i32
    %86 = arith.index_cast %c2_i32 : i32 to index
    %c0_20 = arith.constant 0 : index
    %c0_21 = arith.constant 0 : index
    %87 = vector.load %arg2[%86, %c0_20, %c0_21] : memref<8x8x640xf32, #tpu.memory_space<vmem>>, vector<1x8x640xf32>
    %88 = vector.shape_cast %87 : vector<1x8x640xf32> to vector<8x640xf32>
    %cst_22 = arith.constant dense<0.000000e+00> : vector<8x384xf32>
    %89 = tpu.matmul %85, %3, %cst_22 {dimension_numbers = #tpu.dot_dimension_numbers<[1], [0], [0], [1], [0, 0, 1, 1], [], []>} : vector<8x128xf32>, vector<128x384xf32>, vector<8x384xf32> -> vector<8x384xf32>
    %90 = vector.extract_strided_slice %88 {offsets = [0, 0], sizes = [8, 128], strides = [1, 1]} : vector<8x640xf32> to vector<8x128xf32>
    %91 = vector.extract_strided_slice %89 {offsets = [0, 0], sizes = [8, 128], strides = [1, 1]} : vector<8x384xf32> to vector<8x128xf32>
    %92 = arith.addf %90, %91 : vector<8x128xf32>
    %93 = arith.negf %92 : vector<8x128xf32>
    %94 = math.exp %93 : vector<8x128xf32>
    %cst_23 = arith.constant 1.000000e+00 : f32
    %95 = vector.broadcast %cst_23 : f32 to vector<8x128xf32>
    %96 = arith.addf %95, %94 : vector<8x128xf32>
    %97 = arith.divf %95, %96 : vector<8x128xf32>
    %98 = vector.extract_strided_slice %88 {offsets = [0, 128], sizes = [8, 128], strides = [1, 1]} : vector<8x640xf32> to vector<8x128xf32>
    %99 = vector.extract_strided_slice %89 {offsets = [0, 128], sizes = [8, 128], strides = [1, 1]} : vector<8x384xf32> to vector<8x128xf32>
    %100 = arith.addf %98, %99 : vector<8x128xf32>
    %101 = math.tanh %100 : vector<8x128xf32>
    %102 = vector.extract_strided_slice %88 {offsets = [0, 256], sizes = [8, 128], strides = [1, 1]} : vector<8x640xf32> to vector<8x128xf32>
    %103 = vector.extract_strided_slice %88 {offsets = [0, 384], sizes = [8, 128], strides = [1, 1]} : vector<8x640xf32> to vector<8x128xf32>
    %104 = vector.extract_strided_slice %88 {offsets = [0, 512], sizes = [8, 128], strides = [1, 1]} : vector<8x640xf32> to vector<8x128xf32>
    %105 = vector.extract_strided_slice %89 {offsets = [0, 256], sizes = [8, 128], strides = [1, 1]} : vector<8x384xf32> to vector<8x128xf32>
    %106 = arith.addf %104, %105 : vector<8x128xf32>
    %107 = arith.negf %106 : vector<8x128xf32>
    %108 = math.exp %107 : vector<8x128xf32>
    %cst_24 = arith.constant 1.000000e+00 : f32
    %109 = vector.broadcast %cst_24 : f32 to vector<8x128xf32>
    %110 = arith.addf %109, %108 : vector<8x128xf32>
    %111 = arith.divf %109, %110 : vector<8x128xf32>
    %112 = arith.mulf %97, %102 : vector<8x128xf32>
    %cst_25 = arith.constant 1.000000e+00 : f32
    %113 = vector.broadcast %cst_25 : f32 to vector<8x128xf32>
    %114 = arith.subf %113, %112 : vector<8x128xf32>
    %115 = arith.mulf %114, %83 : vector<8x128xf32>
    %116 = arith.mulf %112, %101 : vector<8x128xf32>
    %117 = arith.addf %115, %116 : vector<8x128xf32>
    %cst_26 = arith.constant 1.000000e+00 : f32
    %118 = vector.broadcast %cst_26 : f32 to vector<8x128xf32>
    %119 = arith.subf %118, %97 : vector<8x128xf32>
    %120 = arith.mulf %119, %83 : vector<8x128xf32>
    %121 = arith.mulf %97, %103 : vector<8x128xf32>
    %122 = arith.mulf %121, %101 : vector<8x128xf32>
    %123 = arith.addf %120, %122 : vector<8x128xf32>
    %124 = math.tanh %117 : vector<8x128xf32>
    %125 = arith.mulf %111, %124 : vector<8x128xf32>
    %c3_i32 = arith.constant 3 : i32
    %126 = arith.index_cast %c3_i32 : i32 to index
    %c0_27 = arith.constant 0 : index
    %c0_28 = arith.constant 0 : index
    %127 = vector.load %arg2[%126, %c0_27, %c0_28] : memref<8x8x640xf32, #tpu.memory_space<vmem>>, vector<1x8x640xf32>
    %128 = vector.shape_cast %127 : vector<1x8x640xf32> to vector<8x640xf32>
    %cst_29 = arith.constant dense<0.000000e+00> : vector<8x384xf32>
    %129 = tpu.matmul %125, %3, %cst_29 {dimension_numbers = #tpu.dot_dimension_numbers<[1], [0], [0], [1], [0, 0, 1, 1], [], []>} : vector<8x128xf32>, vector<128x384xf32>, vector<8x384xf32> -> vector<8x384xf32>
    %130 = vector.extract_strided_slice %128 {offsets = [0, 0], sizes = [8, 128], strides = [1, 1]} : vector<8x640xf32> to vector<8x128xf32>
    %131 = vector.extract_strided_slice %129 {offsets = [0, 0], sizes = [8, 128], strides = [1, 1]} : vector<8x384xf32> to vector<8x128xf32>
    %132 = arith.addf %130, %131 : vector<8x128xf32>
    %133 = arith.negf %132 : vector<8x128xf32>
    %134 = math.exp %133 : vector<8x128xf32>
    %cst_30 = arith.constant 1.000000e+00 : f32
    %135 = vector.broadcast %cst_30 : f32 to vector<8x128xf32>
    %136 = arith.addf %135, %134 : vector<8x128xf32>
    %137 = arith.divf %135, %136 : vector<8x128xf32>
    %138 = vector.extract_strided_slice %128 {offsets = [0, 128], sizes = [8, 128], strides = [1, 1]} : vector<8x640xf32> to vector<8x128xf32>
    %139 = vector.extract_strided_slice %129 {offsets = [0, 128], sizes = [8, 128], strides = [1, 1]} : vector<8x384xf32> to vector<8x128xf32>
    %140 = arith.addf %138, %139 : vector<8x128xf32>
    %141 = math.tanh %140 : vector<8x128xf32>
    %142 = vector.extract_strided_slice %128 {offsets = [0, 256], sizes = [8, 128], strides = [1, 1]} : vector<8x640xf32> to vector<8x128xf32>
    %143 = vector.extract_strided_slice %128 {offsets = [0, 384], sizes = [8, 128], strides = [1, 1]} : vector<8x640xf32> to vector<8x128xf32>
    %144 = vector.extract_strided_slice %128 {offsets = [0, 512], sizes = [8, 128], strides = [1, 1]} : vector<8x640xf32> to vector<8x128xf32>
    %145 = vector.extract_strided_slice %129 {offsets = [0, 256], sizes = [8, 128], strides = [1, 1]} : vector<8x384xf32> to vector<8x128xf32>
    %146 = arith.addf %144, %145 : vector<8x128xf32>
    %147 = arith.negf %146 : vector<8x128xf32>
    %148 = math.exp %147 : vector<8x128xf32>
    %cst_31 = arith.constant 1.000000e+00 : f32
    %149 = vector.broadcast %cst_31 : f32 to vector<8x128xf32>
    %150 = arith.addf %149, %148 : vector<8x128xf32>
    %151 = arith.divf %149, %150 : vector<8x128xf32>
    %152 = arith.mulf %137, %142 : vector<8x128xf32>
    %cst_32 = arith.constant 1.000000e+00 : f32
    %153 = vector.broadcast %cst_32 : f32 to vector<8x128xf32>
    %154 = arith.subf %153, %152 : vector<8x128xf32>
    %155 = arith.mulf %154, %123 : vector<8x128xf32>
    %156 = arith.mulf %152, %141 : vector<8x128xf32>
    %157 = arith.addf %155, %156 : vector<8x128xf32>
    %cst_33 = arith.constant 1.000000e+00 : f32
    %158 = vector.broadcast %cst_33 : f32 to vector<8x128xf32>
    %159 = arith.subf %158, %137 : vector<8x128xf32>
    %160 = arith.mulf %159, %123 : vector<8x128xf32>
    %161 = arith.mulf %137, %143 : vector<8x128xf32>
    %162 = arith.mulf %161, %141 : vector<8x128xf32>
    %163 = arith.addf %160, %162 : vector<8x128xf32>
    %164 = math.tanh %157 : vector<8x128xf32>
    %165 = arith.mulf %151, %164 : vector<8x128xf32>
    %c4_i32 = arith.constant 4 : i32
    %166 = arith.index_cast %c4_i32 : i32 to index
    %c0_34 = arith.constant 0 : index
    %c0_35 = arith.constant 0 : index
    %167 = vector.load %arg2[%166, %c0_34, %c0_35] : memref<8x8x640xf32, #tpu.memory_space<vmem>>, vector<1x8x640xf32>
    %168 = vector.shape_cast %167 : vector<1x8x640xf32> to vector<8x640xf32>
    %cst_36 = arith.constant dense<0.000000e+00> : vector<8x384xf32>
    %169 = tpu.matmul %165, %3, %cst_36 {dimension_numbers = #tpu.dot_dimension_numbers<[1], [0], [0], [1], [0, 0, 1, 1], [], []>} : vector<8x128xf32>, vector<128x384xf32>, vector<8x384xf32> -> vector<8x384xf32>
    %170 = vector.extract_strided_slice %168 {offsets = [0, 0], sizes = [8, 128], strides = [1, 1]} : vector<8x640xf32> to vector<8x128xf32>
    %171 = vector.extract_strided_slice %169 {offsets = [0, 0], sizes = [8, 128], strides = [1, 1]} : vector<8x384xf32> to vector<8x128xf32>
    %172 = arith.addf %170, %171 : vector<8x128xf32>
    %173 = arith.negf %172 : vector<8x128xf32>
    %174 = math.exp %173 : vector<8x128xf32>
    %cst_37 = arith.constant 1.000000e+00 : f32
    %175 = vector.broadcast %cst_37 : f32 to vector<8x128xf32>
    %176 = arith.addf %175, %174 : vector<8x128xf32>
    %177 = arith.divf %175, %176 : vector<8x128xf32>
    %178 = vector.extract_strided_slice %168 {offsets = [0, 128], sizes = [8, 128], strides = [1, 1]} : vector<8x640xf32> to vector<8x128xf32>
    %179 = vector.extract_strided_slice %169 {offsets = [0, 128], sizes = [8, 128], strides = [1, 1]} : vector<8x384xf32> to vector<8x128xf32>
    %180 = arith.addf %178, %179 : vector<8x128xf32>
    %181 = math.tanh %180 : vector<8x128xf32>
    %182 = vector.extract_strided_slice %168 {offsets = [0, 256], sizes = [8, 128], strides = [1, 1]} : vector<8x640xf32> to vector<8x128xf32>
    %183 = vector.extract_strided_slice %168 {offsets = [0, 384], sizes = [8, 128], strides = [1, 1]} : vector<8x640xf32> to vector<8x128xf32>
    %184 = vector.extract_strided_slice %168 {offsets = [0, 512], sizes = [8, 128], strides = [1, 1]} : vector<8x640xf32> to vector<8x128xf32>
    %185 = vector.extract_strided_slice %169 {offsets = [0, 256], sizes = [8, 128], strides = [1, 1]} : vector<8x384xf32> to vector<8x128xf32>
    %186 = arith.addf %184, %185 : vector<8x128xf32>
    %187 = arith.negf %186 : vector<8x128xf32>
    %188 = math.exp %187 : vector<8x128xf32>
    %cst_38 = arith.constant 1.000000e+00 : f32
    %189 = vector.broadcast %cst_38 : f32 to vector<8x128xf32>
    %190 = arith.addf %189, %188 : vector<8x128xf32>
    %191 = arith.divf %189, %190 : vector<8x128xf32>
    %192 = arith.mulf %177, %182 : vector<8x128xf32>
    %cst_39 = arith.constant 1.000000e+00 : f32
    %193 = vector.broadcast %cst_39 : f32 to vector<8x128xf32>
    %194 = arith.subf %193, %192 : vector<8x128xf32>
    %195 = arith.mulf %194, %163 : vector<8x128xf32>
    %196 = arith.mulf %192, %181 : vector<8x128xf32>
    %197 = arith.addf %195, %196 : vector<8x128xf32>
    %cst_40 = arith.constant 1.000000e+00 : f32
    %198 = vector.broadcast %cst_40 : f32 to vector<8x128xf32>
    %199 = arith.subf %198, %177 : vector<8x128xf32>
    %200 = arith.mulf %199, %163 : vector<8x128xf32>
    %201 = arith.mulf %177, %183 : vector<8x128xf32>
    %202 = arith.mulf %201, %181 : vector<8x128xf32>
    %203 = arith.addf %200, %202 : vector<8x128xf32>
    %204 = math.tanh %197 : vector<8x128xf32>
    %205 = arith.mulf %191, %204 : vector<8x128xf32>
    %c5_i32 = arith.constant 5 : i32
    %206 = arith.index_cast %c5_i32 : i32 to index
    %c0_41 = arith.constant 0 : index
    %c0_42 = arith.constant 0 : index
    %207 = vector.load %arg2[%206, %c0_41, %c0_42] : memref<8x8x640xf32, #tpu.memory_space<vmem>>, vector<1x8x640xf32>
    %208 = vector.shape_cast %207 : vector<1x8x640xf32> to vector<8x640xf32>
    %cst_43 = arith.constant dense<0.000000e+00> : vector<8x384xf32>
    %209 = tpu.matmul %205, %3, %cst_43 {dimension_numbers = #tpu.dot_dimension_numbers<[1], [0], [0], [1], [0, 0, 1, 1], [], []>} : vector<8x128xf32>, vector<128x384xf32>, vector<8x384xf32> -> vector<8x384xf32>
    %210 = vector.extract_strided_slice %208 {offsets = [0, 0], sizes = [8, 128], strides = [1, 1]} : vector<8x640xf32> to vector<8x128xf32>
    %211 = vector.extract_strided_slice %209 {offsets = [0, 0], sizes = [8, 128], strides = [1, 1]} : vector<8x384xf32> to vector<8x128xf32>
    %212 = arith.addf %210, %211 : vector<8x128xf32>
    %213 = arith.negf %212 : vector<8x128xf32>
    %214 = math.exp %213 : vector<8x128xf32>
    %cst_44 = arith.constant 1.000000e+00 : f32
    %215 = vector.broadcast %cst_44 : f32 to vector<8x128xf32>
    %216 = arith.addf %215, %214 : vector<8x128xf32>
    %217 = arith.divf %215, %216 : vector<8x128xf32>
    %218 = vector.extract_strided_slice %208 {offsets = [0, 128], sizes = [8, 128], strides = [1, 1]} : vector<8x640xf32> to vector<8x128xf32>
    %219 = vector.extract_strided_slice %209 {offsets = [0, 128], sizes = [8, 128], strides = [1, 1]} : vector<8x384xf32> to vector<8x128xf32>
    %220 = arith.addf %218, %219 : vector<8x128xf32>
    %221 = math.tanh %220 : vector<8x128xf32>
    %222 = vector.extract_strided_slice %208 {offsets = [0, 256], sizes = [8, 128], strides = [1, 1]} : vector<8x640xf32> to vector<8x128xf32>
    %223 = vector.extract_strided_slice %208 {offsets = [0, 384], sizes = [8, 128], strides = [1, 1]} : vector<8x640xf32> to vector<8x128xf32>
    %224 = vector.extract_strided_slice %208 {offsets = [0, 512], sizes = [8, 128], strides = [1, 1]} : vector<8x640xf32> to vector<8x128xf32>
    %225 = vector.extract_strided_slice %209 {offsets = [0, 256], sizes = [8, 128], strides = [1, 1]} : vector<8x384xf32> to vector<8x128xf32>
    %226 = arith.addf %224, %225 : vector<8x128xf32>
    %227 = arith.negf %226 : vector<8x128xf32>
    %228 = math.exp %227 : vector<8x128xf32>
    %cst_45 = arith.constant 1.000000e+00 : f32
    %229 = vector.broadcast %cst_45 : f32 to vector<8x128xf32>
    %230 = arith.addf %229, %228 : vector<8x128xf32>
    %231 = arith.divf %229, %230 : vector<8x128xf32>
    %232 = arith.mulf %217, %222 : vector<8x128xf32>
    %cst_46 = arith.constant 1.000000e+00 : f32
    %233 = vector.broadcast %cst_46 : f32 to vector<8x128xf32>
    %234 = arith.subf %233, %232 : vector<8x128xf32>
    %235 = arith.mulf %234, %203 : vector<8x128xf32>
    %236 = arith.mulf %232, %221 : vector<8x128xf32>
    %237 = arith.addf %235, %236 : vector<8x128xf32>
    %cst_47 = arith.constant 1.000000e+00 : f32
    %238 = vector.broadcast %cst_47 : f32 to vector<8x128xf32>
    %239 = arith.subf %238, %217 : vector<8x128xf32>
    %240 = arith.mulf %239, %203 : vector<8x128xf32>
    %241 = arith.mulf %217, %223 : vector<8x128xf32>
    %242 = arith.mulf %241, %221 : vector<8x128xf32>
    %243 = arith.addf %240, %242 : vector<8x128xf32>
    %244 = math.tanh %237 : vector<8x128xf32>
    %245 = arith.mulf %231, %244 : vector<8x128xf32>
    %c6_i32 = arith.constant 6 : i32
    %246 = arith.index_cast %c6_i32 : i32 to index
    %c0_48 = arith.constant 0 : index
    %c0_49 = arith.constant 0 : index
    %247 = vector.load %arg2[%246, %c0_48, %c0_49] : memref<8x8x640xf32, #tpu.memory_space<vmem>>, vector<1x8x640xf32>
    %248 = vector.shape_cast %247 : vector<1x8x640xf32> to vector<8x640xf32>
    %cst_50 = arith.constant dense<0.000000e+00> : vector<8x384xf32>
    %249 = tpu.matmul %245, %3, %cst_50 {dimension_numbers = #tpu.dot_dimension_numbers<[1], [0], [0], [1], [0, 0, 1, 1], [], []>} : vector<8x128xf32>, vector<128x384xf32>, vector<8x384xf32> -> vector<8x384xf32>
    %250 = vector.extract_strided_slice %248 {offsets = [0, 0], sizes = [8, 128], strides = [1, 1]} : vector<8x640xf32> to vector<8x128xf32>
    %251 = vector.extract_strided_slice %249 {offsets = [0, 0], sizes = [8, 128], strides = [1, 1]} : vector<8x384xf32> to vector<8x128xf32>
    %252 = arith.addf %250, %251 : vector<8x128xf32>
    %253 = arith.negf %252 : vector<8x128xf32>
    %254 = math.exp %253 : vector<8x128xf32>
    %cst_51 = arith.constant 1.000000e+00 : f32
    %255 = vector.broadcast %cst_51 : f32 to vector<8x128xf32>
    %256 = arith.addf %255, %254 : vector<8x128xf32>
    %257 = arith.divf %255, %256 : vector<8x128xf32>
    %258 = vector.extract_strided_slice %248 {offsets = [0, 128], sizes = [8, 128], strides = [1, 1]} : vector<8x640xf32> to vector<8x128xf32>
    %259 = vector.extract_strided_slice %249 {offsets = [0, 128], sizes = [8, 128], strides = [1, 1]} : vector<8x384xf32> to vector<8x128xf32>
    %260 = arith.addf %258, %259 : vector<8x128xf32>
    %261 = math.tanh %260 : vector<8x128xf32>
    %262 = vector.extract_strided_slice %248 {offsets = [0, 256], sizes = [8, 128], strides = [1, 1]} : vector<8x640xf32> to vector<8x128xf32>
    %263 = vector.extract_strided_slice %248 {offsets = [0, 384], sizes = [8, 128], strides = [1, 1]} : vector<8x640xf32> to vector<8x128xf32>
    %264 = vector.extract_strided_slice %248 {offsets = [0, 512], sizes = [8, 128], strides = [1, 1]} : vector<8x640xf32> to vector<8x128xf32>
    %265 = vector.extract_strided_slice %249 {offsets = [0, 256], sizes = [8, 128], strides = [1, 1]} : vector<8x384xf32> to vector<8x128xf32>
    %266 = arith.addf %264, %265 : vector<8x128xf32>
    %267 = arith.negf %266 : vector<8x128xf32>
    %268 = math.exp %267 : vector<8x128xf32>
    %cst_52 = arith.constant 1.000000e+00 : f32
    %269 = vector.broadcast %cst_52 : f32 to vector<8x128xf32>
    %270 = arith.addf %269, %268 : vector<8x128xf32>
    %271 = arith.divf %269, %270 : vector<8x128xf32>
    %272 = arith.mulf %257, %262 : vector<8x128xf32>
    %cst_53 = arith.constant 1.000000e+00 : f32
    %273 = vector.broadcast %cst_53 : f32 to vector<8x128xf32>
    %274 = arith.subf %273, %272 : vector<8x128xf32>
    %275 = arith.mulf %274, %243 : vector<8x128xf32>
    %276 = arith.mulf %272, %261 : vector<8x128xf32>
    %277 = arith.addf %275, %276 : vector<8x128xf32>
    %cst_54 = arith.constant 1.000000e+00 : f32
    %278 = vector.broadcast %cst_54 : f32 to vector<8x128xf32>
    %279 = arith.subf %278, %257 : vector<8x128xf32>
    %280 = arith.mulf %279, %243 : vector<8x128xf32>
    %281 = arith.mulf %257, %263 : vector<8x128xf32>
    %282 = arith.mulf %281, %261 : vector<8x128xf32>
    %283 = arith.addf %280, %282 : vector<8x128xf32>
    %284 = math.tanh %277 : vector<8x128xf32>
    %285 = arith.mulf %271, %284 : vector<8x128xf32>
    %c7_i32 = arith.constant 7 : i32
    %286 = arith.index_cast %c7_i32 : i32 to index
    %c0_55 = arith.constant 0 : index
    %c0_56 = arith.constant 0 : index
    %287 = vector.load %arg2[%286, %c0_55, %c0_56] : memref<8x8x640xf32, #tpu.memory_space<vmem>>, vector<1x8x640xf32>
    %288 = vector.shape_cast %287 : vector<1x8x640xf32> to vector<8x640xf32>
    %cst_57 = arith.constant dense<0.000000e+00> : vector<8x384xf32>
    %289 = tpu.matmul %285, %3, %cst_57 {dimension_numbers = #tpu.dot_dimension_numbers<[1], [0], [0], [1], [0, 0, 1, 1], [], []>} : vector<8x128xf32>, vector<128x384xf32>, vector<8x384xf32> -> vector<8x384xf32>
    %290 = vector.extract_strided_slice %288 {offsets = [0, 0], sizes = [8, 128], strides = [1, 1]} : vector<8x640xf32> to vector<8x128xf32>
    %291 = vector.extract_strided_slice %289 {offsets = [0, 0], sizes = [8, 128], strides = [1, 1]} : vector<8x384xf32> to vector<8x128xf32>
    %292 = arith.addf %290, %291 : vector<8x128xf32>
    %293 = arith.negf %292 : vector<8x128xf32>
    %294 = math.exp %293 : vector<8x128xf32>
    %cst_58 = arith.constant 1.000000e+00 : f32
    %295 = vector.broadcast %cst_58 : f32 to vector<8x128xf32>
    %296 = arith.addf %295, %294 : vector<8x128xf32>
    %297 = arith.divf %295, %296 : vector<8x128xf32>
    %298 = vector.extract_strided_slice %288 {offsets = [0, 128], sizes = [8, 128], strides = [1, 1]} : vector<8x640xf32> to vector<8x128xf32>
    %299 = vector.extract_strided_slice %289 {offsets = [0, 128], sizes = [8, 128], strides = [1, 1]} : vector<8x384xf32> to vector<8x128xf32>
    %300 = arith.addf %298, %299 : vector<8x128xf32>
    %301 = math.tanh %300 : vector<8x128xf32>
    %302 = vector.extract_strided_slice %288 {offsets = [0, 256], sizes = [8, 128], strides = [1, 1]} : vector<8x640xf32> to vector<8x128xf32>
    %303 = vector.extract_strided_slice %288 {offsets = [0, 384], sizes = [8, 128], strides = [1, 1]} : vector<8x640xf32> to vector<8x128xf32>
    %304 = vector.extract_strided_slice %288 {offsets = [0, 512], sizes = [8, 128], strides = [1, 1]} : vector<8x640xf32> to vector<8x128xf32>
    %305 = vector.extract_strided_slice %289 {offsets = [0, 256], sizes = [8, 128], strides = [1, 1]} : vector<8x384xf32> to vector<8x128xf32>
    %306 = arith.addf %304, %305 : vector<8x128xf32>
    %307 = arith.negf %306 : vector<8x128xf32>
    %308 = math.exp %307 : vector<8x128xf32>
    %cst_59 = arith.constant 1.000000e+00 : f32
    %309 = vector.broadcast %cst_59 : f32 to vector<8x128xf32>
    %310 = arith.addf %309, %308 : vector<8x128xf32>
    %311 = arith.divf %309, %310 : vector<8x128xf32>
    %312 = arith.mulf %297, %302 : vector<8x128xf32>
    %cst_60 = arith.constant 1.000000e+00 : f32
    %313 = vector.broadcast %cst_60 : f32 to vector<8x128xf32>
    %314 = arith.subf %313, %312 : vector<8x128xf32>
    %315 = arith.mulf %314, %283 : vector<8x128xf32>
    %316 = arith.mulf %312, %301 : vector<8x128xf32>
    %317 = arith.addf %315, %316 : vector<8x128xf32>
    %cst_61 = arith.constant 1.000000e+00 : f32
    %318 = vector.broadcast %cst_61 : f32 to vector<8x128xf32>
    %319 = arith.subf %318, %297 : vector<8x128xf32>
    %320 = arith.mulf %319, %283 : vector<8x128xf32>
    %321 = arith.mulf %297, %303 : vector<8x128xf32>
    %322 = arith.mulf %321, %301 : vector<8x128xf32>
    %323 = arith.addf %320, %322 : vector<8x128xf32>
    %324 = math.tanh %317 : vector<8x128xf32>
    %325 = arith.mulf %311, %324 : vector<8x128xf32>
    %c8_i32 = arith.constant 8 : i32
    %c0_62 = arith.constant 0 : index
    %c0_63 = arith.constant 0 : index
    %326 = vector.load %arg4[%c0_62, %c0_63] : memref<8x128xf32, #tpu.memory_space<vmem>>, vector<8x128xf32>
    tpu.vector_store %arg4[%c0_62, %c0_63], %325 {strides = array<i32>} : memref<8x128xf32, #tpu.memory_space<vmem>>, vector<8x128xf32>,
    %c0_64 = arith.constant 0 : index
    %c0_65 = arith.constant 0 : index
    %327 = vector.load %arg5[%c0_64, %c0_65] : memref<8x128xf32, #tpu.memory_space<vmem>>, vector<8x128xf32>
    tpu.vector_store %arg5[%c0_64, %c0_65], %323 {strides = array<i32>} : memref<8x128xf32, #tpu.memory_space<vmem>>, vector<8x128xf32>,
    return
  }
  func.func @transform_0(%arg0: i32, %arg1: i32) -> (i32, i32, i32) {
    %c0_i32 = arith.constant 0 : i32
    %c0_i32_0 = arith.constant 0 : i32
    return %arg1, %arg0, %c0_i32 : i32, i32, i32
  }
  func.func @transform_1(%arg0: i32, %arg1: i32) -> (i32, i32) {
    %c0_i32 = arith.constant 0 : i32
    %c0_i32_0 = arith.constant 0 : i32
    %c0_i32_1 = arith.constant 0 : i32
    return %c0_i32, %c0_i32_0 : i32, i32
  }
  func.func @transform_2(%arg0: i32, %arg1: i32) -> (i32, i32) {
    %c0_i32 = arith.constant 0 : i32
    %c0_i32_0 = arith.constant 0 : i32
    return %arg0, %c0_i32 : i32, i32
  }
}

</mosaic_0001>

<llo_original>
// kernel: tpu_custom_call.1
$region0: #{tpu_custom_call.1}
  #allocation0 [shape = 'u32[]', space=smem, size = 0x4, offset = 0x4, fixed_abs, tag = 'smem constant byte address 0x4 - core index']
  #allocation1 [shape = 'u32[144,128]{1,0:T(1,128)}', space=vmem, size = 0x12000, scoped, tag = 'internal scratch']
  #allocation2 [shape = 'f32[8,128]{1,0:T(8,128)}', space=vmem, size = 0x1000, scoped, tag = 'scratch operand']
  %s0 = inlined_call_operand.hbm [shape: f32[8,8,640], index: 0, kind: input, shape index: {}]
  %s1 = inlined_call_operand.hbm [shape: f32[128,384], index: 1, kind: input, shape index: {}]
  %s2 = inlined_call_operand.hbm [shape: f32[8,128], index: 2, kind: output, shape index: {}]
  %s3 = sld [smem:[#allocation0]]
  $region30: #{tpu_custom_call.1} parent=0
    _
  %s5 = ssub.s32 1, %s3
  %s6 = scalar_select 0, %s5, %s3
  $region1: #{tpu_custom_call.1} parent=0
    #allocation3 [shape = 'u8[163840]{0}', space=vmem, size = 0x28000, scoped, tag = 'input window, operand 0, single buffered']
    #allocation4 [shape = 's32[1]{0}', space=sflag, size = 0x4, scoped, tag = 'scoped memory for tpu_custom_call.1']
    #allocation5 [shape = 's32[1]{0}', space=sflag, size = 0x4, scoped, tag = 'scoped memory for tpu_custom_call.1']
    #allocation6 [shape = 'u8[196608]{0}', space=vmem, size = 0x30000, scoped, tag = 'input window, operand 1, single buffered']
    #allocation7 [shape = 's32[1]{0}', space=sflag, size = 0x4, scoped, tag = 'scoped memory for tpu_custom_call.1']
    #allocation8 [shape = 'u8[4096]{0}', space=vmem, size = 0x1000, scoped, tag = 'output window, operand 0, single buffered']
    %7 = vsyncpa [#allocation4], 0
    %8 = vsyncpa [#allocation7], 0
    %9 = vsyncpa [#allocation5], 0
    // Predicated region
    $region2: #{tpu_custom_call.1} parent=1 // pred_check
      _
    $region3: #{tpu_custom_call.1} parent=1 // pred_check_branch
      %11 = sbr.rel (0) target = $region5
    $region4: #{tpu_custom_call.1} parent=1 // pred_region
      %s13 = ssub.s32 5120, 5120
      %14 = vsyncadd [#allocation4], %s13
      %s15 = sshll.u32 [#allocation3], 4
      %s16 = int_to_ptr.vmem [resolvable:$true] %s15
      %21 = dma.hbm_to_vmem [thread:$0]  %s0, 5120, %s16, [#allocation4], 640, 640, 40
    $region5: #{tpu_custom_call.1} parent=1 // pred_fallthru
      _
    // Predicated region
    $region6: #{tpu_custom_call.1} parent=1 // pred_check
      _
    $region7: #{tpu_custom_call.1} parent=1 // pred_check_branch
      %23 = sbr.rel (0) target = $region9
    $region8: #{tpu_custom_call.1} parent=1 // pred_region
      %s25 = ssub.s32 6144, 6144
      %26 = vsyncadd [#allocation7], %s25
      %s27 = sshll.u32 [#allocation6], 4
      %s28 = int_to_ptr.vmem [resolvable:$true] %s27
      %33 = dma.hbm_to_vmem [thread:$0]  %s1, 6144, %s28, [#allocation7], 384, 384, 24
    $region9: #{tpu_custom_call.1} parent=1 // pred_fallthru
      _
    // Predicated region
    $region10: #{tpu_custom_call.1} parent=1 // pred_check
      _
    $region11: #{tpu_custom_call.1} parent=1 // pred_check_branch
      %35 = sbr.rel (0) target = $region13
    $region12: #{tpu_custom_call.1} parent=1 // pred_region
      %36 = dma.done [#allocation4], 5120
    $region13: #{tpu_custom_call.1} parent=1 // pred_fallthru
      _
    // Predicated region
    $region14: #{tpu_custom_call.1} parent=1 // pred_check
      _
    $region15: #{tpu_custom_call.1} parent=1 // pred_check_branch
      %38 = sbr.rel (0) target = $region17
    $region16: #{tpu_custom_call.1} parent=1 // pred_region
      %39 = dma.done [#allocation7], 6144
    $region17: #{tpu_custom_call.1} parent=1 // pred_fallthru
      _
    %p40 = scmp.eq.s32.totalorder 0, 0
    // Predicated region
    $region18: #{tpu_custom_call.1} parent=1 // pred_check
      %p41 = pneg %p40
    $region19: #{tpu_custom_call.1} parent=1 // pred_check_branch
      %43 = sbr.rel (%p41) target = $region21
    $region20: #{tpu_custom_call.1} parent=1 // pred_region
      %44 = vst [vmem:[#allocation8] sm:$0xff] 0.0
      %45 = vst [vmem:[#allocation2] sm:$0xff] 0.0
    $region21: #{tpu_custom_call.1} parent=1 // pred_fallthru
      _
    %v46 = vld [vmem:[#allocation6] sm:$0xff]
    %v47 = vld [vmem:[#allocation6 + $0x8] sm:$0xff]
    %v48 = vld [vmem:[#allocation6 + $0x10] sm:$0xff]
    %v49 = vld [vmem:[#allocation6 + $0x18] sm:$0xff]
    %v50 = vld [vmem:[#allocation6 + $0x20] sm:$0xff]
    %v51 = vld [vmem:[#allocation6 + $0x28] sm:$0xff]
    %v52 = vld [vmem:[#allocation6 + $0x30] sm:$0xff]
    %v53 = vld [vmem:[#allocation6 + $0x38] sm:$0xff]
    %v54 = vld [vmem:[#allocation6 + $0x40] sm:$0xff]
    %v55 = vld [vmem:[#allocation6 + $0x48] sm:$0xff]
    %v56 = vld [vmem:[#allocation6 + $0x50] sm:$0xff]
    %v57 = vld [vmem:[#allocation6 + $0x58] sm:$0xff]
    %v58 = vld [vmem:[#allocation6 + $0x60] sm:$0xff]
    %v59 = vld [vmem:[#allocation6 + $0x68] sm:$0xff]
    %v60 = vld [vmem:[#allocation6 + $0x70] sm:$0xff]
    %v61 = vld [vmem:[#allocation6 + $0x78] sm:$0xff]
    %v62 = vld [vmem:[#allocation6 + $0x80] sm:$0xff]
    %v63 = vld [vmem:[#allocation6 + $0x88] sm:$0xff]
    %v64 = vld [vmem:[#allocation6 + $0x90] sm:$0xff]
    %v65 = vld [vmem:[#allocation6 + $0x98] sm:$0xff]
    %v66 = vld [vmem:[#allocation6 + $0xa0] sm:$0xff]
    %v67 = vld [vmem:[#allocation6 + $0xa8] sm:$0xff]
    %v68 = vld [vmem:[#allocation6 + $0xb0] sm:$0xff]
    %v69 = vld [vmem:[#allocation6 + $0xb8] sm:$0xff]
    %v70 = vld [vmem:[#allocation6 + $0xc0] sm:$0xff]
    %v71 = vld [vmem:[#allocation6 + $0xc8] sm:$0xff]
    %v72 = vld [vmem:[#allocation6 + $0xd0] sm:$0xff]
    %v73 = vld [vmem:[#allocation6 + $0xd8] sm:$0xff]
    %v74 = vld [vmem:[#allocation6 + $0xe0] sm:$0xff]
    %v75 = vld [vmem:[#allocation6 + $0xe8] sm:$0xff]
    %v76 = vld [vmem:[#allocation6 + $0xf0] sm:$0xff]
    %v77 = vld [vmem:[#allocation6 + $0xf8] sm:$0xff]
    %v78 = vld [vmem:[#allocation6 + $0x100] sm:$0xff]
    %v79 = vld [vmem:[#allocation6 + $0x108] sm:$0xff]
    %v80 = vld [vmem:[#allocation6 + $0x110] sm:$0xff]
    %v81 = vld [vmem:[#allocation6 + $0x118] sm:$0xff]
    %v82 = vld [vmem:[#allocation6 + $0x120] sm:$0xff]
    %v83 = vld [vmem:[#allocation6 + $0x128] sm:$0xff]
    %v84 = vld [vmem:[#allocation6 + $0x130] sm:$0xff]
    %v85 = vld [vmem:[#allocation6 + $0x138] sm:$0xff]
    %v86 = vld [vmem:[#allocation6 + $0x140] sm:$0xff]
    %v87 = vld [vmem:[#allocation6 + $0x148] sm:$0xff]
    %v88 = vld [vmem:[#allocation6 + $0x150] sm:$0xff]
    %v89 = vld [vmem:[#allocation6 + $0x158] sm:$0xff]
    %v90 = vld [vmem:[#allocation6 + $0x160] sm:$0xff]
    %v91 = vld [vmem:[#allocation6 + $0x168] sm:$0xff]
    %v92 = vld [vmem:[#allocation6 + $0x170] sm:$0xff]
    %v93 = vld [vmem:[#allocation6 + $0x178] sm:$0xff]
    %v94 = vld [vmem:[#allocation8] sm:$0xff]
    %v95 = vld [vmem:[#allocation2] sm:$0xff]
    %v96 = vld [vmem:[#allocation3] sm:$0xff]
    %v97 = vld [vmem:[#allocation3 + $0x8] sm:$0xff]
    %v98 = vld [vmem:[#allocation3 + $0x10] sm:$0xff]
    %v99 = vld [vmem:[#allocation3 + $0x18] sm:$0xff]
    %v100 = vld [vmem:[#allocation3 + $0x20] sm:$0xff]
    %101 = vmatprep.subr.mxu0 %v47
    %102 = vmatpush1.msra.mxu0 %v46
    %103 = vmatprep.subr.mxu0 %v50
    %104 = vmatpush1.msra.mxu0 %v49
    %105 = vmatprep.subr.mxu0 %v53
    %106 = vmatpush1.msra.mxu0 %v52
    %107 = vmatprep.subr.mxu0 %v56
    %108 = vmatpush1.msra.mxu0 %v55
    %109 = vmatprep.subr.mxu0 %v59
    %110 = vmatpush1.msra.mxu0 %v58
    %111 = vmatprep.subr.mxu0 %v62
    %112 = vmatpush1.msra.mxu0 %v61
    %113 = vmatprep.subr.mxu0 %v65
    %114 = vmatpush1.msra.mxu0 %v64
    %115 = vmatprep.subr.mxu0 %v68
    %116 = vmatpush1.msra.mxu0 %v67
    %117 = vmatprep.subr.mxu0 %v71
    %118 = vmatpush1.msra.mxu0 %v70
    %119 = vmatprep.subr.mxu0 %v74
    %120 = vmatpush1.msra.mxu0 %v73
    %121 = vmatprep.subr.mxu0 %v77
    %122 = vmatpush1.msra.mxu0 %v76
    %123 = vmatprep.subr.mxu0 %v80
    %124 = vmatpush1.msra.mxu0 %v79
    %125 = vmatprep.subr.mxu0 %v83
    %126 = vmatpush1.msra.mxu0 %v82
    %127 = vmatprep.subr.mxu0 %v86
    %128 = vmatpush1.msra.mxu0 %v85
    %129 = vmatprep.subr.mxu0 %v89
    %130 = vmatpush1.msra.mxu0 %v88
    %131 = vmatprep.subr.mxu0 %v92
    %132 = vmatpush1.msra.mxu0 %v91
    %133 = vmatprep.subr.mxu0 0.0
    %134 = vmatpush1.msra.mxu0 0.0
    %135 = vmatprep.subr.mxu0 0.0
    %136 = vmatpush1.msra.mxu0 0.0
    %137 = vmatprep.subr.mxu0 0.0
    %138 = vmatpush1.msra.mxu0 0.0
    %139 = vmatprep.subr.mxu0 0.0
    %140 = vmatpush1.msra.mxu0 0.0
    %141 = vmatprep.subr.mxu0 0.0
    %142 = vmatpush1.msra.mxu0 0.0
    %143 = vmatprep.subr.mxu0 0.0
    %144 = vmatpush1.msra.mxu0 0.0
    %145 = vmatprep.subr.mxu0 0.0
    %146 = vmatpush1.msra.mxu0 0.0
    %147 = vmatprep.subr.mxu0 0.0
    %148 = vmatpush1.msra.mxu0 0.0
    %149 = vmatprep.subr.mxu0 0.0
    %150 = vmatpush1.msra.mxu0 0.0
    %151 = vmatprep.subr.mxu0 0.0
    %152 = vmatpush1.msra.mxu0 0.0
    %153 = vmatprep.subr.mxu0 0.0
    %154 = vmatpush1.msra.mxu0 0.0
    %155 = vmatprep.subr.mxu0 0.0
    %156 = vmatpush1.msra.mxu0 0.0
    %157 = vmatprep.subr.mxu0 0.0
    %158 = vmatpush1.msra.mxu0 0.0
    %159 = vmatprep.subr.mxu0 0.0
    %160 = vmatpush1.msra.mxu0 0.0
    %161 = vmatprep.subr.mxu0 0.0
    %162 = vmatpush1.msra.mxu0 0.0
    %163 = vmatprep.subr.mxu0 0.0
    %164 = vmatpush1.msra.mxu0 0.0
    %165 = vmatprep.mubr.f32.mxu0 0.0
    %166 = vmatmul.mubr.f32.gmra.mrb[0].mxu0 %v94
    %v167 = vpop.f32.mrb[0].mxu0
    %v168 = vadd.f32 0.0, %v167
    %v169 = vpop.f32.mrb[0].mxu0
    %v170 = vadd.f32 0.0, %v169
    %171 = vdwg.mxu0
    %172 = vmatprep.subr.mxu0 0.0
    %173 = vmatpush1.msra.mxu0 %v48
    %174 = vmatprep.subr.mxu0 0.0
    %175 = vmatpush1.msra.mxu0 %v51
    %176 = vmatprep.subr.mxu0 0.0
    %177 = vmatpush1.msra.mxu0 %v54
    %178 = vmatprep.subr.mxu0 0.0
    %179 = vmatpush1.msra.mxu0 %v57
    %180 = vmatprep.subr.mxu0 0.0
    %181 = vmatpush1.msra.mxu0 %v60
    %182 = vmatprep.subr.mxu0 0.0
    %183 = vmatpush1.msra.mxu0 %v63
    %184 = vmatprep.subr.mxu0 0.0
    %185 = vmatpush1.msra.mxu0 %v66
    %186 = vmatprep.subr.mxu0 0.0
    %187 = vmatpush1.msra.mxu0 %v69
    %188 = vmatprep.subr.mxu0 0.0
    %189 = vmatpush1.msra.mxu0 %v72
    %190 = vmatprep.subr.mxu0 0.0
    %191 = vmatpush1.msra.mxu0 %v75
    %192 = vmatprep.subr.mxu0 0.0
    %193 = vmatpush1.msra.mxu0 %v78
    %194 = vmatprep.subr.mxu0 0.0
    %195 = vmatpush1.msra.mxu0 %v81
    %196 = vmatprep.subr.mxu0 0.0
    %197 = vmatpush1.msra.mxu0 %v84
    %198 = vmatprep.subr.mxu0 0.0
    %199 = vmatpush1.msra.mxu0 %v87
    %200 = vmatprep.subr.mxu0 0.0
    %201 = vmatpush1.msra.mxu0 %v90
    %202 = vmatprep.subr.mxu0 0.0
    %203 = vmatpush1.msra.mxu0 %v93
    %204 = vmatprep.subr.mxu0 0.0
    %205 = vmatpush1.msra.mxu0 0.0
    %206 = vmatprep.subr.mxu0 0.0
    %207 = vmatpush1.msra.mxu0 0.0
    %208 = vmatprep.subr.mxu0 0.0
    %209 = vmatpush1.msra.mxu0 0.0
    %210 = vmatprep.subr.mxu0 0.0
    %211 = vmatpush1.msra.mxu0 0.0
    %212 = vmatprep.subr.mxu0 0.0
    %213 = vmatpush1.msra.mxu0 0.0
    %214 = vmatprep.subr.mxu0 0.0
    %215 = vmatpush1.msra.mxu0 0.0
    %216 = vmatprep.subr.mxu0 0.0
    %217 = vmatpush1.msra.mxu0 0.0
    %218 = vmatprep.subr.mxu0 0.0
    %219 = vmatpush1.msra.mxu0 0.0
    %220 = vmatprep.subr.mxu0 0.0
    %221 = vmatpush1.msra.mxu0 0.0
    %222 = vmatprep.subr.mxu0 0.0
    %223 = vmatpush1.msra.mxu0 0.0
    %224 = vmatprep.subr.mxu0 0.0
    %225 = vmatpush1.msra.mxu0 0.0
    %226 = vmatprep.subr.mxu0 0.0
    %227 = vmatpush1.msra.mxu0 0.0
    %228 = vmatprep.subr.mxu0 0.0
    %229 = vmatpush1.msra.mxu0 0.0
    %230 = vmatprep.subr.mxu0 0.0
    %231 = vmatpush1.msra.mxu0 0.0
    %232 = vmatprep.subr.mxu0 0.0
    %233 = vmatpush1.msra.mxu0 0.0
    %234 = vmatprep.subr.mxu0 0.0
    %235 = vmatpush1.msra.mxu0 0.0
    %236 = vmatprep.mubr.f32.mxu0 0.0
    %237 = vmatmul.mubr.f32.gmra.mrb[0].mxu0 %v94
    %v238 = vpop.f32.mrb[0].mxu0
    %v239 = vadd.f32 0.0, %v238
    %v240 = vpop.f32.mrb[0].mxu0
    %241 = vdwg.mxu0
    %v242 = vadd.f32 %v96, %v168
    %v243 = vxor.u32 %v242, 2147483648
    %v244 = vmul.f32 %v243, 1.442695
    %v245 = vpow.pop %v244
    %v246 = vadd.f32 %v245, 1.0
    %v247 = vrcp.pop %v246
    %v248 = vmul.f32 1.0, %v247
    %v249 = vadd.f32 %v97, %v170
    %v250 = vtanh.pop %v249
    %v251 = vadd.f32 %v100, %v239
    %v252 = vxor.u32 %v251, 2147483648
    %v253 = vmul.f32 %v252, 1.442695
    %v254 = vpow.pop %v253
    %v255 = vadd.f32 %v254, 1.0
    %v256 = vrcp.pop %v255
    %v257 = vmul.f32 1.0, %v256
    %v258 = vmul.f32 %v248, %v98
    %v259 = vsub.f32 1.0, %v258
    %v260 = vmul.f32 %v259, %v95
    %v261 = vmul.f32 %v258, %v250
    %v262 = vadd.f32 %v260, %v261
    %v263 = vsub.f32 1.0, %v248
    %v264 = vmul.f32 %v263, %v95
    %v265 = vmul.f32 %v248, %v99
    %v266 = vmul.f32 %v265, %v250
    %v267 = vadd.f32 %v264, %v266
    %v268 = vtanh.pop %v262
    %v269 = vmul.f32 %v257, %v268
    %s270 = scalar_lea.vmem [#allocation3], 40
    %v271 = vld [vmem:[%s270] sm:$0xff]
    %v272 = vld [vmem:[%s270 + $0x8] sm:$0xff]
    %v273 = vld [vmem:[%s270 + $0x10] sm:$0xff]
    %v274 = vld [vmem:[%s270 + $0x18] sm:$0xff]
    %v275 = vld [vmem:[%s270 + $0x20] sm:$0xff]
    %276 = vmatprep.subr.mxu0 %v47
    %277 = vmatpush1.msra.mxu0 %v46
    %278 = vmatprep.subr.mxu0 %v50
    %279 = vmatpush1.msra.mxu0 %v49
    %280 = vmatprep.subr.mxu0 %v53
    %281 = vmatpush1.msra.mxu0 %v52
    %282 = vmatprep.subr.mxu0 %v56
    %283 = vmatpush1.msra.mxu0 %v55
    %284 = vmatprep.subr.mxu0 %v59
    %285 = vmatpush1.msra.mxu0 %v58
    %286 = vmatprep.subr.mxu0 %v62
    %287 = vmatpush1.msra.mxu0 %v61
    %288 = vmatprep.subr.mxu0 %v65
    %289 = vmatpush1.msra.mxu0 %v64
    %290 = vmatprep.subr.mxu0 %v68
    %291 = vmatpush1.msra.mxu0 %v67
    %292 = vmatprep.subr.mxu0 %v71
    %293 = vmatpush1.msra.mxu0 %v70
    %294 = vmatprep.subr.mxu0 %v74
    %295 = vmatpush1.msra.mxu0 %v73
    %296 = vmatprep.subr.mxu0 %v77
    %297 = vmatpush1.msra.mxu0 %v76
    %298 = vmatprep.subr.mxu0 %v80
    %299 = vmatpush1.msra.mxu0 %v79
    %300 = vmatprep.subr.mxu0 %v83
    %301 = vmatpush1.msra.mxu0 %v82
    %302 = vmatprep.subr.mxu0 %v86
    %303 = vmatpush1.msra.mxu0 %v85
    %304 = vmatprep.subr.mxu0 %v89
    %305 = vmatpush1.msra.mxu0 %v88
    %306 = vmatprep.subr.mxu0 %v92
    %307 = vmatpush1.msra.mxu0 %v91
    %308 = vmatprep.subr.mxu0 0.0
    %309 = vmatpush1.msra.mxu0 0.0
    %310 = vmatprep.subr.mxu0 0.0
    %311 = vmatpush1.msra.mxu0 0.0
    %312 = vmatprep.subr.mxu0 0.0
    %313 = vmatpush1.msra.mxu0 0.0
    %314 = vmatprep.subr.mxu0 0.0
    %315 = vmatpush1.msra.mxu0 0.0
    %316 = vmatprep.subr.mxu0 0.0
    %317 = vmatpush1.msra.mxu0 0.0
    %318 = vmatprep.subr.mxu0 0.0
    %319 = vmatpush1.msra.mxu0 0.0
    %320 = vmatprep.subr.mxu0 0.0
    %321 = vmatpush1.msra.mxu0 0.0
    %322 = vmatprep.subr.mxu0 0.0
    %323 = vmatpush1.msra.mxu0 0.0
    %324 = vmatprep.subr.mxu0 0.0
    %325 = vmatpush1.msra.mxu0 0.0
    %326 = vmatprep.subr.mxu0 0.0
    %327 = vmatpush1.msra.mxu0 0.0
    %328 = vmatprep.subr.mxu0 0.0
    %329 = vmatpush1.msra.mxu0 0.0
    %330 = vmatprep.subr.mxu0 0.0
    %331 = vmatpush1.msra.mxu0 0.0
    %332 = vmatprep.subr.mxu0 0.0
    %333 = vmatpush1.msra.mxu0 0.0
    %334 = vmatprep.subr.mxu0 0.0
    %335 = vmatpush1.msra.mxu0 0.0
    %336 = vmatprep.subr.mxu0 0.0
    %337 = vmatpush1.msra.mxu0 0.0
    %338 = vmatprep.subr.mxu0 0.0
    %339 = vmatpush1.msra.mxu0 0.0
    %340 = vmatprep.mubr.f32.mxu0 0.0
    %341 = vmatmul.mubr.f32.gmra.mrb[0].mxu0 %v269
    %v342 = vpop.f32.mrb[0].mxu0
    %v343 = vadd.f32 0.0, %v342
    %v344 = vpop.f32.mrb[0].mxu0
    %v345 = vadd.f32 0.0, %v344
    %346 = vdwg.mxu0
    %347 = vmatprep.subr.mxu0 0.0
    %348 = vmatpush1.msra.mxu0 %v48
    %349 = vmatprep.subr.mxu0 0.0
    %350 = vmatpush1.msra.mxu0 %v51
    %351 = vmatprep.subr.mxu0 0.0
    %352 = vmatpush1.msra.mxu0 %v54
    %353 = vmatprep.subr.mxu0 0.0
    %354 = vmatpush1.msra.mxu0 %v57
    %355 = vmatprep.subr.mxu0 0.0
    %356 = vmatpush1.msra.mxu0 %v60
    %357 = vmatprep.subr.mxu0 0.0
    %358 = vmatpush1.msra.mxu0 %v63
    %359 = vmatprep.subr.mxu0 0.0
    %360 = vmatpush1.msra.mxu0 %v66
    %361 = vmatprep.subr.mxu0 0.0
    %362 = vmatpush1.msra.mxu0 %v69
    %363 = vmatprep.subr.mxu0 0.0
    %364 = vmatpush1.msra.mxu0 %v72
    %365 = vmatprep.subr.mxu0 0.0
    %366 = vmatpush1.msra.mxu0 %v75
    %367 = vmatprep.subr.mxu0 0.0
    %368 = vmatpush1.msra.mxu0 %v78
    %369 = vmatprep.subr.mxu0 0.0
    %370 = vmatpush1.msra.mxu0 %v81
    %371 = vmatprep.subr.mxu0 0.0
    %372 = vmatpush1.msra.mxu0 %v84
    %373 = vmatprep.subr.mxu0 0.0
    %374 = vmatpush1.msra.mxu0 %v87
    %375 = vmatprep.subr.mxu0 0.0
    %376 = vmatpush1.msra.mxu0 %v90
    %377 = vmatprep.subr.mxu0 0.0
    %378 = vmatpush1.msra.mxu0 %v93
    %379 = vmatprep.subr.mxu0 0.0
    %380 = vmatpush1.msra.mxu0 0.0
    %381 = vmatprep.subr.mxu0 0.0
    %382 = vmatpush1.msra.mxu0 0.0
    %383 = vmatprep.subr.mxu0 0.0
    %384 = vmatpush1.msra.mxu0 0.0
    %385 = vmatprep.subr.mxu0 0.0
    %386 = vmatpush1.msra.mxu0 0.0
    %387 = vmatprep.subr.mxu0 0.0
    %388 = vmatpush1.msra.mxu0 0.0
    %389 = vmatprep.subr.mxu0 0.0
    %390 = vmatpush1.msra.mxu0 0.0
    %391 = vmatprep.subr.mxu0 0.0
    %392 = vmatpush1.msra.mxu0 0.0
    %393 = vmatprep.subr.mxu0 0.0
    %394 = vmatpush1.msra.mxu0 0.0
    %395 = vmatprep.subr.mxu0 0.0
    %396 = vmatpush1.msra.mxu0 0.0
    %397 = vmatprep.subr.mxu0 0.0
    %398 = vmatpush1.msra.mxu0 0.0
    %399 = vmatprep.subr.mxu0 0.0
    %400 = vmatpush1.msra.mxu0 0.0
    %401 = vmatprep.subr.mxu0 0.0
    %402 = vmatpush1.msra.mxu0 0.0
    %403 = vmatprep.subr.mxu0 0.0
    %404 = vmatpush1.msra.mxu0 0.0
    %405 = vmatprep.subr.mxu0 0.0
    %406 = vmatpush1.msra.mxu0 0.0
    %407 = vmatprep.subr.mxu0 0.0
    %408 = vmatpush1.msra.mxu0 0.0
    %409 = vmatprep.subr.mxu0 0.0
    %410 = vmatpush1.msra.mxu0 0.0
    %411 = vmatprep.mubr.f32.mxu0 0.0
    %412 = vmatmul.mubr.f32.gmra.mrb[0].mxu0 %v269
    %v413 = vpop.f32.mrb[0].mxu0
    %v414 = vadd.f32 0.0, %v413
    %v415 = vpop.f32.mrb[0].mxu0
    %416 = vdwg.mxu0
    %v417 = vadd.f32 %v271, %v343
    %v418 = vxor.u32 %v417, 2147483648
    %v419 = vmul.f32 %v418, 1.442695
    %v420 = vpow.pop %v419
    %v421 = vadd.f32 %v420, 1.0
    %v422 = vrcp.pop %v421
    %v423 = vmul.f32 1.0, %v422
    %v424 = vadd.f32 %v272, %v345
    %v425 = vtanh.pop %v424
    %v426 = vadd.f32 %v275, %v414
    %v427 = vxor.u32 %v426, 2147483648
    %v428 = vmul.f32 %v427, 1.442695
    %v429 = vpow.pop %v428
    %v430 = vadd.f32 %v429, 1.0
    %v431 = vrcp.pop %v430
    %v432 = vmul.f32 1.0, %v431
    %v433 = vmul.f32 %v423, %v273
    %v434 = vsub.f32 1.0, %v433
    %v435 = vmul.f32 %v434, %v267
    %v436 = vmul.f32 %v433, %v425
    %v437 = vadd.f32 %v435, %v436
    %v438 = vsub.f32 1.0, %v423
    %v439 = vmul.f32 %v438, %v267
    %v440 = vmul.f32 %v423, %v274
    %v441 = vmul.f32 %v440, %v425
    %v442 = vadd.f32 %v439, %v441
    %v443 = vtanh.pop %v437
    %v444 = vmul.f32 %v432, %v443
    %s445 = scalar_lea.vmem [#allocation3], 80
    %v446 = vld [vmem:[%s445] sm:$0xff]
    %v447 = vld [vmem:[%s445 + $0x8] sm:$0xff]
    %v448 = vld [vmem:[%s445 + $0x10] sm:$0xff]
    %v449 = vld [vmem:[%s445 + $0x18] sm:$0xff]
    %v450 = vld [vmem:[%s445 + $0x20] sm:$0xff]
    %451 = vmatprep.subr.mxu0 %v47
    %452 = vmatpush1.msra.mxu0 %v46
    %453 = vmatprep.subr.mxu0 %v50
    %454 = vmatpush1.msra.mxu0 %v49
    %455 = vmatprep.subr.mxu0 %v53
    %456 = vmatpush1.msra.mxu0 %v52
    %457 = vmatprep.subr.mxu0 %v56
    %458 = vmatpush1.msra.mxu0 %v55
    %459 = vmatprep.subr.mxu0 %v59
    %460 = vmatpush1.msra.mxu0 %v58
    %461 = vmatprep.subr.mxu0 %v62
    %462 = vmatpush1.msra.mxu0 %v61
    %463 = vmatprep.subr.mxu0 %v65
    %464 = vmatpush1.msra.mxu0 %v64
    %465 = vmatprep.subr.mxu0 %v68
    %466 = vmatpush1.msra.mxu0 %v67
    %467 = vmatprep.subr.mxu0 %v71
    %468 = vmatpush1.msra.mxu0 %v70
    %469 = vmatprep.subr.mxu0 %v74
    %470 = vmatpush1.msra.mxu0 %v73
    %471 = vmatprep.subr.mxu0 %v77
    %472 = vmatpush1.msra.mxu0 %v76
    %473 = vmatprep.subr.mxu0 %v80
    %474 = vmatpush1.msra.mxu0 %v79
    %475 = vmatprep.subr.mxu0 %v83
    %476 = vmatpush1.msra.mxu0 %v82
    %477 = vmatprep.subr.mxu0 %v86
    %478 = vmatpush1.msra.mxu0 %v85
    %479 = vmatprep.subr.mxu0 %v89
    %480 = vmatpush1.msra.mxu0 %v88
    %481 = vmatprep.subr.mxu0 %v92
    %482 = vmatpush1.msra.mxu0 %v91
    %483 = vmatprep.subr.mxu0 0.0
    %484 = vmatpush1.msra.mxu0 0.0
    %485 = vmatprep.subr.mxu0 0.0
    %486 = vmatpush1.msra.mxu0 0.0
    %487 = vmatprep.subr.mxu0 0.0
    %488 = vmatpush1.msra.mxu0 0.0
    %489 = vmatprep.subr.mxu0 0.0
    %490 = vmatpush1.msra.mxu0 0.0
    %491 = vmatprep.subr.mxu0 0.0
    %492 = vmatpush1.msra.mxu0 0.0
    %493 = vmatprep.subr.mxu0 0.0
    %494 = vmatpush1.msra.mxu0 0.0
    %495 = vmatprep.subr.mxu0 0.0
    %496 = vmatpush1.msra.mxu0 0.0
    %497 = vmatprep.subr.mxu0 0.0
    %498 = vmatpush1.msra.mxu0 0.0
    %499 = vmatprep.subr.mxu0 0.0
    %500 = vmatpush1.msra.mxu0 0.0
    %501 = vmatprep.subr.mxu0 0.0
    %502 = vmatpush1.msra.mxu0 0.0
    %503 = vmatprep.subr.mxu0 0.0
    %504 = vmatpush1.msra.mxu0 0.0
    %505 = vmatprep.subr.mxu0 0.0
    %506 = vmatpush1.msra.mxu0 0.0
    %507 = vmatprep.subr.mxu0 0.0
    %508 = vmatpush1.msra.mxu0 0.0
    %509 = vmatprep.subr.mxu0 0.0
    %510 = vmatpush1.msra.mxu0 0.0
    %511 = vmatprep.subr.mxu0 0.0
    %512 = vmatpush1.msra.mxu0 0.0
    %513 = vmatprep.subr.mxu0 0.0
    %514 = vmatpush1.msra.mxu0 0.0
    %515 = vmatprep.mubr.f32.mxu0 0.0
    %516 = vmatmul.mubr.f32.gmra.mrb[0].mxu0 %v444
    %v517 = vpop.f32.mrb[0].mxu0
    %v518 = vadd.f32 0.0, %v517
    %v519 = vpop.f32.mrb[0].mxu0
    %v520 = vadd.f32 0.0, %v519
    %521 = vdwg.mxu0
    %522 = vmatprep.subr.mxu0 0.0
    %523 = vmatpush1.msra.mxu0 %v48
    %524 = vmatprep.subr.mxu0 0.0
    %525 = vmatpush1.msra.mxu0 %v51
    %526 = vmatprep.subr.mxu0 0.0
    %527 = vmatpush1.msra.mxu0 %v54
    %528 = vmatprep.subr.mxu0 0.0
    %529 = vmatpush1.msra.mxu0 %v57
    %530 = vmatprep.subr.mxu0 0.0
    %531 = vmatpush1.msra.mxu0 %v60
    %532 = vmatprep.subr.mxu0 0.0
    %533 = vmatpush1.msra.mxu0 %v63
    %534 = vmatprep.subr.mxu0 0.0
    %535 = vmatpush1.msra.mxu0 %v66
    %536 = vmatprep.subr.mxu0 0.0
    %537 = vmatpush1.msra.mxu0 %v69
    %538 = vmatprep.subr.mxu0 0.0
    %539 = vmatpush1.msra.mxu0 %v72
    %540 = vmatprep.subr.mxu0 0.0
    %541 = vmatpush1.msra.mxu0 %v75
    %542 = vmatprep.subr.mxu0 0.0
    %543 = vmatpush1.msra.mxu0 %v78
    %544 = vmatprep.subr.mxu0 0.0
    %545 = vmatpush1.msra.mxu0 %v81
    %546 = vmatprep.subr.mxu0 0.0
    %547 = vmatpush1.msra.mxu0 %v84
    %548 = vmatprep.subr.mxu0 0.0
    %549 = vmatpush1.msra.mxu0 %v87
    %550 = vmatprep.subr.mxu0 0.0
    %551 = vmatpush1.msra.mxu0 %v90
    %552 = vmatprep.subr.mxu0 0.0
    %553 = vmatpush1.msra.mxu0 %v93
    %554 = vmatprep.subr.mxu0 0.0
    %555 = vmatpush1.msra.mxu0 0.0
    %556 = vmatprep.subr.mxu0 0.0
    %557 = vmatpush1.msra.mxu0 0.0
    %558 = vmatprep.subr.mxu0 0.0
    %559 = vmatpush1.msra.mxu0 0.0
    %560 = vmatprep.subr.mxu0 0.0
    %561 = vmatpush1.msra.mxu0 0.0
    %562 = vmatprep.subr.mxu0 0.0
    %563 = vmatpush1.msra.mxu0 0.0
    %564 = vmatprep.subr.mxu0 0.0
    %565 = vmatpush1.msra.mxu0 0.0
    %566 = vmatprep.subr.mxu0 0.0
    %567 = vmatpush1.msra.mxu0 0.0
    %568 = vmatprep.subr.mxu0 0.0
    %569 = vmatpush1.msra.mxu0 0.0
    %570 = vmatprep.subr.mxu0 0.0
    %571 = vmatpush1.msra.mxu0 0.0
    %572 = vmatprep.subr.mxu0 0.0
    %573 = vmatpush1.msra.mxu0 0.0
    %574 = vmatprep.subr.mxu0 0.0
    %575 = vmatpush1.msra.mxu0 0.0
    %576 = vmatprep.subr.mxu0 0.0
    %577 = vmatpush1.msra.mxu0 0.0
    %578 = vmatprep.subr.mxu0 0.0
    %579 = vmatpush1.msra.mxu0 0.0
    %580 = vmatprep.subr.mxu0 0.0
    %581 = vmatpush1.msra.mxu0 0.0
    %582 = vmatprep.subr.mxu0 0.0
    %583 = vmatpush1.msra.mxu0 0.0
    %584 = vmatprep.subr.mxu0 0.0
    %585 = vmatpush1.msra.mxu0 0.0
    %586 = vmatprep.mubr.f32.mxu0 0.0
    %587 = vmatmul.mubr.f32.gmra.mrb[0].mxu0 %v444
    %v588 = vpop.f32.mrb[0].mxu0
    %v589 = vadd.f32 0.0, %v588
    %v590 = vpop.f32.mrb[0].mxu0
    %591 = vdwg.mxu0
    %v592 = vadd.f32 %v446, %v518
    %v593 = vxor.u32 %v592, 2147483648
    %v594 = vmul.f32 %v593, 1.442695
    %v595 = vpow.pop %v594
    %v596 = vadd.f32 %v595, 1.0
    %v597 = vrcp.pop %v596
    %v598 = vmul.f32 1.0, %v597
    %v599 = vadd.f32 %v447, %v520
    %v600 = vtanh.pop %v599
    %v601 = vadd.f32 %v450, %v589
    %v602 = vxor.u32 %v601, 2147483648
    %v603 = vmul.f32 %v602, 1.442695
    %v604 = vpow.pop %v603
    %v605 = vadd.f32 %v604, 1.0
    %v606 = vrcp.pop %v605
    %v607 = vmul.f32 1.0, %v606
    %v608 = vmul.f32 %v598, %v448
    %v609 = vsub.f32 1.0, %v608
    %v610 = vmul.f32 %v609, %v442
    %v611 = vmul.f32 %v608, %v600
    %v612 = vadd.f32 %v610, %v611
    %v613 = vsub.f32 1.0, %v598
    %v614 = vmul.f32 %v613, %v442
    %v615 = vmul.f32 %v598, %v449
    %v616 = vmul.f32 %v615, %v600
    %v617 = vadd.f32 %v614, %v616
    %v618 = vtanh.pop %v612
    %v619 = vmul.f32 %v607, %v618
    %s620 = scalar_lea.vmem [#allocation3], 120
    %v621 = vld [vmem:[%s620] sm:$0xff]
    %v622 = vld [vmem:[%s620 + $0x8] sm:$0xff]
    %v623 = vld [vmem:[%s620 + $0x10] sm:$0xff]
    %v624 = vld [vmem:[%s620 + $0x18] sm:$0xff]
    %v625 = vld [vmem:[%s620 + $0x20] sm:$0xff]
    %626 = vmatprep.subr.mxu0 %v47
    %627 = vmatpush1.msra.mxu0 %v46
    %628 = vmatprep.subr.mxu0 %v50
    %629 = vmatpush1.msra.mxu0 %v49
    %630 = vmatprep.subr.mxu0 %v53
    %631 = vmatpush1.msra.mxu0 %v52
    %632 = vmatprep.subr.mxu0 %v56
    %633 = vmatpush1.msra.mxu0 %v55
    %634 = vmatprep.subr.mxu0 %v59
    %635 = vmatpush1.msra.mxu0 %v58
    %636 = vmatprep.subr.mxu0 %v62
    %637 = vmatpush1.msra.mxu0 %v61
    %638 = vmatprep.subr.mxu0 %v65
    %639 = vmatpush1.msra.mxu0 %v64
    %640 = vmatprep.subr.mxu0 %v68
    %641 = vmatpush1.msra.mxu0 %v67
    %642 = vmatprep.subr.mxu0 %v71
    %643 = vmatpush1.msra.mxu0 %v70
    %644 = vmatprep.subr.mxu0 %v74
    %645 = vmatpush1.msra.mxu0 %v73
    %646 = vmatprep.subr.mxu0 %v77
    %647 = vmatpush1.msra.mxu0 %v76
    %648 = vmatprep.subr.mxu0 %v80
    %649 = vmatpush1.msra.mxu0 %v79
    %650 = vmatprep.subr.mxu0 %v83
    %651 = vmatpush1.msra.mxu0 %v82
    %652 = vmatprep.subr.mxu0 %v86
    %653 = vmatpush1.msra.mxu0 %v85
    %654 = vmatprep.subr.mxu0 %v89
    %655 = vmatpush1.msra.mxu0 %v88
    %656 = vmatprep.subr.mxu0 %v92
    %657 = vmatpush1.msra.mxu0 %v91
    %658 = vmatprep.subr.mxu0 0.0
    %659 = vmatpush1.msra.mxu0 0.0
    %660 = vmatprep.subr.mxu0 0.0
    %661 = vmatpush1.msra.mxu0 0.0
    %662 = vmatprep.subr.mxu0 0.0
    %663 = vmatpush1.msra.mxu0 0.0
    %664 = vmatprep.subr.mxu0 0.0
    %665 = vmatpush1.msra.mxu0 0.0
    %666 = vmatprep.subr.mxu0 0.0
    %667 = vmatpush1.msra.mxu0 0.0
    %668 = vmatprep.subr.mxu0 0.0
    %669 = vmatpush1.msra.mxu0 0.0
    %670 = vmatprep.subr.mxu0 0.0
    %671 = vmatpush1.msra.mxu0 0.0
    %672 = vmatprep.subr.mxu0 0.0
    %673 = vmatpush1.msra.mxu0 0.0
    %674 = vmatprep.subr.mxu0 0.0
    %675 = vmatpush1.msra.mxu0 0.0
    %676 = vmatprep.subr.mxu0 0.0
    %677 = vmatpush1.msra.mxu0 0.0
    %678 = vmatprep.subr.mxu0 0.0
    %679 = vmatpush1.msra.mxu0 0.0
    %680 = vmatprep.subr.mxu0 0.0
    %681 = vmatpush1.msra.mxu0 0.0
    %682 = vmatprep.subr.mxu0 0.0
    %683 = vmatpush1.msra.mxu0 0.0
    %684 = vmatprep.subr.mxu0 0.0
    %685 = vmatpush1.msra.mxu0 0.0
    %686 = vmatprep.subr.mxu0 0.0
    %687 = vmatpush1.msra.mxu0 0.0
    %688 = vmatprep.subr.mxu0 0.0
    %689 = vmatpush1.msra.mxu0 0.0
    %690 = vmatprep.mubr.f32.mxu0 0.0
    %691 = vmatmul.mubr.f32.gmra.mrb[0].mxu0 %v619
    %v692 = vpop.f32.mrb[0].mxu0
    %v693 = vadd.f32 0.0, %v692
    %v694 = vpop.f32.mrb[0].mxu0
    %v695 = vadd.f32 0.0, %v694
    %696 = vdwg.mxu0
    %697 = vmatprep.subr.mxu0 0.0
    %698 = vmatpush1.msra.mxu0 %v48
    %699 = vmatprep.subr.mxu0 0.0
    %700 = vmatpush1.msra.mxu0 %v51
    %701 = vmatprep.subr.mxu0 0.0
    %702 = vmatpush1.msra.mxu0 %v54
    %703 = vmatprep.subr.mxu0 0.0
    %704 = vmatpush1.msra.mxu0 %v57
    %705 = vmatprep.subr.mxu0 0.0
    %706 = vmatpush1.msra.mxu0 %v60
    %707 = vmatprep.subr.mxu0 0.0
    %708 = vmatpush1.msra.mxu0 %v63
    %709 = vmatprep.subr.mxu0 0.0
    %710 = vmatpush1.msra.mxu0 %v66
    %711 = vmatprep.subr.mxu0 0.0
    %712 = vmatpush1.msra.mxu0 %v69
    %713 = vmatprep.subr.mxu0 0.0
    %714 = vmatpush1.msra.mxu0 %v72
    %715 = vmatprep.subr.mxu0 0.0
    %716 = vmatpush1.msra.mxu0 %v75
    %717 = vmatprep.subr.mxu0 0.0
    %718 = vmatpush1.msra.mxu0 %v78
    %719 = vmatprep.subr.mxu0 0.0
    %720 = vmatpush1.msra.mxu0 %v81
    %721 = vmatprep.subr.mxu0 0.0
    %722 = vmatpush1.msra.mxu0 %v84
    %723 = vmatprep.subr.mxu0 0.0
    %724 = vmatpush1.msra.mxu0 %v87
    %725 = vmatprep.subr.mxu0 0.0
    %726 = vmatpush1.msra.mxu0 %v90
    %727 = vmatprep.subr.mxu0 0.0
    %728 = vmatpush1.msra.mxu0 %v93
    %729 = vmatprep.subr.mxu0 0.0
    %730 = vmatpush1.msra.mxu0 0.0
    %731 = vmatprep.subr.mxu0 0.0
    %732 = vmatpush1.msra.mxu0 0.0
    %733 = vmatprep.subr.mxu0 0.0
    %734 = vmatpush1.msra.mxu0 0.0
    %735 = vmatprep.subr.mxu0 0.0
    %736 = vmatpush1.msra.mxu0 0.0
    %737 = vmatprep.subr.mxu0 0.0
    %738 = vmatpush1.msra.mxu0 0.0
    %739 = vmatprep.subr.mxu0 0.0
    %740 = vmatpush1.msra.mxu0 0.0
    %741 = vmatprep.subr.mxu0 0.0
    %742 = vmatpush1.msra.mxu0 0.0
    %743 = vmatprep.subr.mxu0 0.0
    %744 = vmatpush1.msra.mxu0 0.0
    %745 = vmatprep.subr.mxu0 0.0
    %746 = vmatpush1.msra.mxu0 0.0
    %747 = vmatprep.subr.mxu0 0.0
    %748 = vmatpush1.msra.mxu0 0.0
    %749 = vmatprep.subr.mxu0 0.0
    %750 = vmatpush1.msra.mxu0 0.0
    %751 = vmatprep.subr.mxu0 0.0
    %752 = vmatpush1.msra.mxu0 0.0
    %753 = vmatprep.subr.mxu0 0.0
    %754 = vmatpush1.msra.mxu0 0.0
    %755 = vmatprep.subr.mxu0 0.0
    %756 = vmatpush1.msra.mxu0 0.0
    %757 = vmatprep.subr.mxu0 0.0
    %758 = vmatpush1.msra.mxu0 0.0
    %759 = vmatprep.subr.mxu0 0.0
    %760 = vmatpush1.msra.mxu0 0.0
    %761 = vmatprep.mubr.f32.mxu0 0.0
    %762 = vmatmul.mubr.f32.gmra.mrb[0].mxu0 %v619
    %v763 = vpop.f32.mrb[0].mxu0
    %v764 = vadd.f32 0.0, %v763
    %v765 = vpop.f32.mrb[0].mxu0
    %766 = vdwg.mxu0
    %v767 = vadd.f32 %v621, %v693
    %v768 = vxor.u32 %v767, 2147483648
    %v769 = vmul.f32 %v768, 1.442695
    %v770 = vpow.pop %v769
    %v771 = vadd.f32 %v770, 1.0
    %v772 = vrcp.pop %v771
    %v773 = vmul.f32 1.0, %v772
    %v774 = vadd.f32 %v622, %v695
    %v775 = vtanh.pop %v774
    %v776 = vadd.f32 %v625, %v764
    %v777 = vxor.u32 %v776, 2147483648
    %v778 = vmul.f32 %v777, 1.442695
    %v779 = vpow.pop %v778
    %v780 = vadd.f32 %v779, 1.0
    %v781 = vrcp.pop %v780
    %v782 = vmul.f32 1.0, %v781
    %v783 = vmul.f32 %v773, %v623
    %v784 = vsub.f32 1.0, %v783
    %v785 = vmul.f32 %v784, %v617
    %v786 = vmul.f32 %v783, %v775
    %v787 = vadd.f32 %v785, %v786
    %v788 = vsub.f32 1.0, %v773
    %v789 = vmul.f32 %v788, %v617
    %v790 = vmul.f32 %v773, %v624
    %v791 = vmul.f32 %v790, %v775
    %v792 = vadd.f32 %v789, %v791
    %v793 = vtanh.pop %v787
    %v794 = vmul.f32 %v782, %v793
    %s795 = scalar_lea.vmem [#allocation3], 160
    %v796 = vld [vmem:[%s795] sm:$0xff]
    %v797 = vld [vmem:[%s795 + $0x8] sm:$0xff]
    %v798 = vld [vmem:[%s795 + $0x10] sm:$0xff]
    %v799 = vld [vmem:[%s795 + $0x18] sm:$0xff]
    %v800 = vld [vmem:[%s795 + $0x20] sm:$0xff]
    %801 = vmatprep.subr.mxu0 %v47
    %802 = vmatpush1.msra.mxu0 %v46
    %803 = vmatprep.subr.mxu0 %v50
    %804 = vmatpush1.msra.mxu0 %v49
    %805 = vmatprep.subr.mxu0 %v53
    %806 = vmatpush1.msra.mxu0 %v52
    %807 = vmatprep.subr.mxu0 %v56
    %808 = vmatpush1.msra.mxu0 %v55
    %809 = vmatprep.subr.mxu0 %v59
    %810 = vmatpush1.msra.mxu0 %v58
    %811 = vmatprep.subr.mxu0 %v62
    %812 = vmatpush1.msra.mxu0 %v61
    %813 = vmatprep.subr.mxu0 %v65
    %814 = vmatpush1.msra.mxu0 %v64
    %815 = vmatprep.subr.mxu0 %v68
    %816 = vmatpush1.msra.mxu0 %v67
    %817 = vmatprep.subr.mxu0 %v71
    %818 = vmatpush1.msra.mxu0 %v70
    %819 = vmatprep.subr.mxu0 %v74
    %820 = vmatpush1.msra.mxu0 %v73
    %821 = vmatprep.subr.mxu0 %v77
    %822 = vmatpush1.msra.mxu0 %v76
    %823 = vmatprep.subr.mxu0 %v80
    %824 = vmatpush1.msra.mxu0 %v79
    %825 = vmatprep.subr.mxu0 %v83
    %826 = vmatpush1.msra.mxu0 %v82
    %827 = vmatprep.subr.mxu0 %v86
    %828 = vmatpush1.msra.mxu0 %v85
    %829 = vmatprep.subr.mxu0 %v89
    %830 = vmatpush1.msra.mxu0 %v88
    %831 = vmatprep.subr.mxu0 %v92
    %832 = vmatpush1.msra.mxu0 %v91
    %833 = vmatprep.subr.mxu0 0.0
    %834 = vmatpush1.msra.mxu0 0.0
    %835 = vmatprep.subr.mxu0 0.0
    %836 = vmatpush1.msra.mxu0 0.0
    %837 = vmatprep.subr.mxu0 0.0
    %838 = vmatpush1.msra.mxu0 0.0
    %839 = vmatprep.subr.mxu0 0.0
    %840 = vmatpush1.msra.mxu0 0.0
    %841 = vmatprep.subr.mxu0 0.0
    %842 = vmatpush1.msra.mxu0 0.0
    %843 = vmatprep.subr.mxu0 0.0
    %844 = vmatpush1.msra.mxu0 0.0
    %845 = vmatprep.subr.mxu0 0.0
    %846 = vmatpush1.msra.mxu0 0.0
    %847 = vmatprep.subr.mxu0 0.0
    %848 = vmatpush1.msra.mxu0 0.0
    %849 = vmatprep.subr.mxu0 0.0
    %850 = vmatpush1.msra.mxu0 0.0
    %851 = vmatprep.subr.mxu0 0.0
    %852 = vmatpush1.msra.mxu0 0.0
    %853 = vmatprep.subr.mxu0 0.0
    %854 = vmatpush1.msra.mxu0 0.0
    %855 = vmatprep.subr.mxu0 0.0
    %856 = vmatpush1.msra.mxu0 0.0
    %857 = vmatprep.subr.mxu0 0.0
    %858 = vmatpush1.msra.mxu0 0.0
    %859 = vmatprep.subr.mxu0 0.0
    %860 = vmatpush1.msra.mxu0 0.0
    %861 = vmatprep.subr.mxu0 0.0
    %862 = vmatpush1.msra.mxu0 0.0
    %863 = vmatprep.subr.mxu0 0.0
    %864 = vmatpush1.msra.mxu0 0.0
    %865 = vmatprep.mubr.f32.mxu0 0.0
    %866 = vmatmul.mubr.f32.gmra.mrb[0].mxu0 %v794
    %v867 = vpop.f32.mrb[0].mxu0
    %v868 = vadd.f32 0.0, %v867
    %v869 = vpop.f32.mrb[0].mxu0
    %v870 = vadd.f32 0.0, %v869
    %871 = vdwg.mxu0
    %872 = vmatprep.subr.mxu0 0.0
    %873 = vmatpush1.msra.mxu0 %v48
    %874 = vmatprep.subr.mxu0 0.0
    %875 = vmatpush1.msra.mxu0 %v51
    %876 = vmatprep.subr.mxu0 0.0
    %877 = vmatpush1.msra.mxu0 %v54
    %878 = vmatprep.subr.mxu0 0.0
    %879 = vmatpush1.msra.mxu0 %v57
    %880 = vmatprep.subr.mxu0 0.0
    %881 = vmatpush1.msra.mxu0 %v60
    %882 = vmatprep.subr.mxu0 0.0
    %883 = vmatpush1.msra.mxu0 %v63
    %884 = vmatprep.subr.mxu0 0.0
    %885 = vmatpush1.msra.mxu0 %v66
    %886 = vmatprep.subr.mxu0 0.0
    %887 = vmatpush1.msra.mxu0 %v69
    %888 = vmatprep.subr.mxu0 0.0
    %889 = vmatpush1.msra.mxu0 %v72
    %890 = vmatprep.subr.mxu0 0.0
    %891 = vmatpush1.msra.mxu0 %v75
    %892 = vmatprep.subr.mxu0 0.0
    %893 = vmatpush1.msra.mxu0 %v78
    %894 = vmatprep.subr.mxu0 0.0
    %895 = vmatpush1.msra.mxu0 %v81
    %896 = vmatprep.subr.mxu0 0.0
    %897 = vmatpush1.msra.mxu0 %v84
    %898 = vmatprep.subr.mxu0 0.0
    %899 = vmatpush1.msra.mxu0 %v87
    %900 = vmatprep.subr.mxu0 0.0
    %901 = vmatpush1.msra.mxu0 %v90
    %902 = vmatprep.subr.mxu0 0.0
    %903 = vmatpush1.msra.mxu0 %v93
    %904 = vmatprep.subr.mxu0 0.0
    %905 = vmatpush1.msra.mxu0 0.0
    %906 = vmatprep.subr.mxu0 0.0
    %907 = vmatpush1.msra.mxu0 0.0
    %908 = vmatprep.subr.mxu0 0.0
    %909 = vmatpush1.msra.mxu0 0.0
    %910 = vmatprep.subr.mxu0 0.0
    %911 = vmatpush1.msra.mxu0 0.0
    %912 = vmatprep.subr.mxu0 0.0
    %913 = vmatpush1.msra.mxu0 0.0
    %914 = vmatprep.subr.mxu0 0.0
    %915 = vmatpush1.msra.mxu0 0.0
    %916 = vmatprep.subr.mxu0 0.0
    %917 = vmatpush1.msra.mxu0 0.0
    %918 = vmatprep.subr.mxu0 0.0
    %919 = vmatpush1.msra.mxu0 0.0
    %920 = vmatprep.subr.mxu0 0.0
    %921 = vmatpush1.msra.mxu0 0.0
    %922 = vmatprep.subr.mxu0 0.0
    %923 = vmatpush1.msra.mxu0 0.0
    %924 = vmatprep.subr.mxu0 0.0
    %925 = vmatpush1.msra.mxu0 0.0
    %926 = vmatprep.subr.mxu0 0.0
    %927 = vmatpush1.msra.mxu0 0.0
    %928 = vmatprep.subr.mxu0 0.0
    %929 = vmatpush1.msra.mxu0 0.0
    %930 = vmatprep.subr.mxu0 0.0
    %931 = vmatpush1.msra.mxu0 0.0
    %932 = vmatprep.subr.mxu0 0.0
    %933 = vmatpush1.msra.mxu0 0.0
    %934 = vmatprep.subr.mxu0 0.0
    %935 = vmatpush1.msra.mxu0 0.0
    %936 = vmatprep.mubr.f32.mxu0 0.0
    %937 = vmatmul.mubr.f32.gmra.mrb[0].mxu0 %v794
    %v938 = vpop.f32.mrb[0].mxu0
    %v939 = vadd.f32 0.0, %v938
    %v940 = vpop.f32.mrb[0].mxu0
    %941 = vdwg.mxu0
    %v942 = vadd.f32 %v796, %v868
    %v943 = vxor.u32 %v942, 2147483648
    %v944 = vmul.f32 %v943, 1.442695
    %v945 = vpow.pop %v944
    %v946 = vadd.f32 %v945, 1.0
    %v947 = vrcp.pop %v946
    %v948 = vmul.f32 1.0, %v947
    %v949 = vadd.f32 %v797, %v870
    %v950 = vtanh.pop %v949
    %v951 = vadd.f32 %v800, %v939
    %v952 = vxor.u32 %v951, 2147483648
    %v953 = vmul.f32 %v952, 1.442695
    %v954 = vpow.pop %v953
    %v955 = vadd.f32 %v954, 1.0
    %v956 = vrcp.pop %v955
    %v957 = vmul.f32 1.0, %v956
    %v958 = vmul.f32 %v948, %v798
    %v959 = vsub.f32 1.0, %v958
    %v960 = vmul.f32 %v959, %v792
    %v961 = vmul.f32 %v958, %v950
    %v962 = vadd.f32 %v960, %v961
    %v963 = vsub.f32 1.0, %v948
    %v964 = vmul.f32 %v963, %v792
    %v965 = vmul.f32 %v948, %v799
    %v966 = vmul.f32 %v965, %v950
    %v967 = vadd.f32 %v964, %v966
    %v968 = vtanh.pop %v962
    %v969 = vmul.f32 %v957, %v968
    %s970 = scalar_lea.vmem [#allocation3], 200
    %v971 = vld [vmem:[%s970] sm:$0xff]
    %v972 = vld [vmem:[%s970 + $0x8] sm:$0xff]
    %v973 = vld [vmem:[%s970 + $0x10] sm:$0xff]
    %v974 = vld [vmem:[%s970 + $0x18] sm:$0xff]
    %v975 = vld [vmem:[%s970 + $0x20] sm:$0xff]
    %976 = vmatprep.subr.mxu0 %v47
    %977 = vmatpush1.msra.mxu0 %v46
    %978 = vmatprep.subr.mxu0 %v50
    %979 = vmatpush1.msra.mxu0 %v49
    %980 = vmatprep.subr.mxu0 %v53
    %981 = vmatpush1.msra.mxu0 %v52
    %982 = vmatprep.subr.mxu0 %v56
    %983 = vmatpush1.msra.mxu0 %v55
    %984 = vmatprep.subr.mxu0 %v59
    %985 = vmatpush1.msra.mxu0 %v58
    %986 = vmatprep.subr.mxu0 %v62
    %987 = vmatpush1.msra.mxu0 %v61
    %988 = vmatprep.subr.mxu0 %v65
    %989 = vmatpush1.msra.mxu0 %v64
    %990 = vmatprep.subr.mxu0 %v68
    %991 = vmatpush1.msra.mxu0 %v67
    %992 = vmatprep.subr.mxu0 %v71
    %993 = vmatpush1.msra.mxu0 %v70
    %994 = vmatprep.subr.mxu0 %v74
    %995 = vmatpush1.msra.mxu0 %v73
    %996 = vmatprep.subr.mxu0 %v77
    %997 = vmatpush1.msra.mxu0 %v76
    %998 = vmatprep.subr.mxu0 %v80
    %999 = vmatpush1.msra.mxu0 %v79
    %1000 = vmatprep.subr.mxu0 %v83
    %1001 = vmatpush1.msra.mxu0 %v82
    %1002 = vmatprep.subr.mxu0 %v86
    %1003 = vmatpush1.msra.mxu0 %v85
    %1004 = vmatprep.subr.mxu0 %v89
    %1005 = vmatpush1.msra.mxu0 %v88
    %1006 = vmatprep.subr.mxu0 %v92
    %1007 = vmatpush1.msra.mxu0 %v91
    %1008 = vmatprep.subr.mxu0 0.0
    %1009 = vmatpush1.msra.mxu0 0.0
    %1010 = vmatprep.subr.mxu0 0.0
    %1011 = vmatpush1.msra.mxu0 0.0
    %1012 = vmatprep.subr.mxu0 0.0
    %1013 = vmatpush1.msra.mxu0 0.0
    %1014 = vmatprep.subr.mxu0 0.0
    %1015 = vmatpush1.msra.mxu0 0.0
    %1016 = vmatprep.subr.mxu0 0.0
    %1017 = vmatpush1.msra.mxu0 0.0
    %1018 = vmatprep.subr.mxu0 0.0
    %1019 = vmatpush1.msra.mxu0 0.0
    %1020 = vmatprep.subr.mxu0 0.0
    %1021 = vmatpush1.msra.mxu0 0.0
    %1022 = vmatprep.subr.mxu0 0.0
    %1023 = vmatpush1.msra.mxu0 0.0
    %1024 = vmatprep.subr.mxu0 0.0
    %1025 = vmatpush1.msra.mxu0 0.0
    %1026 = vmatprep.subr.mxu0 0.0
    %1027 = vmatpush1.msra.mxu0 0.0
    %1028 = vmatprep.subr.mxu0 0.0
    %1029 = vmatpush1.msra.mxu0 0.0
    %1030 = vmatprep.subr.mxu0 0.0
    %1031 = vmatpush1.msra.mxu0 0.0
    %1032 = vmatprep.subr.mxu0 0.0
    %1033 = vmatpush1.msra.mxu0 0.0
    %1034 = vmatprep.subr.mxu0 0.0
    %1035 = vmatpush1.msra.mxu0 0.0
    %1036 = vmatprep.subr.mxu0 0.0
    %1037 = vmatpush1.msra.mxu0 0.0
    %1038 = vmatprep.subr.mxu0 0.0
    %1039 = vmatpush1.msra.mxu0 0.0
    %1040 = vmatprep.mubr.f32.mxu0 0.0
    %1041 = vmatmul.mubr.f32.gmra.mrb[0].mxu0 %v969
    %v1042 = vpop.f32.mrb[0].mxu0
    %v1043 = vadd.f32 0.0, %v1042
    %v1044 = vpop.f32.mrb[0].mxu0
    %v1045 = vadd.f32 0.0, %v1044
    %1046 = vdwg.mxu0
    %1047 = vmatprep.subr.mxu0 0.0
    %1048 = vmatpush1.msra.mxu0 %v48
    %1049 = vmatprep.subr.mxu0 0.0
    %1050 = vmatpush1.msra.mxu0 %v51
    %1051 = vmatprep.subr.mxu0 0.0
    %1052 = vmatpush1.msra.mxu0 %v54
    %1053 = vmatprep.subr.mxu0 0.0
    %1054 = vmatpush1.msra.mxu0 %v57
    %1055 = vmatprep.subr.mxu0 0.0
    %1056 = vmatpush1.msra.mxu0 %v60
    %1057 = vmatprep.subr.mxu0 0.0
    %1058 = vmatpush1.msra.mxu0 %v63
    %1059 = vmatprep.subr.mxu0 0.0
    %1060 = vmatpush1.msra.mxu0 %v66
    %1061 = vmatprep.subr.mxu0 0.0
    %1062 = vmatpush1.msra.mxu0 %v69
    %1063 = vmatprep.subr.mxu0 0.0
    %1064 = vmatpush1.msra.mxu0 %v72
    %1065 = vmatprep.subr.mxu0 0.0
    %1066 = vmatpush1.msra.mxu0 %v75
    %1067 = vmatprep.subr.mxu0 0.0
    %1068 = vmatpush1.msra.mxu0 %v78
    %1069 = vmatprep.subr.mxu0 0.0
    %1070 = vmatpush1.msra.mxu0 %v81
    %1071 = vmatprep.subr.mxu0 0.0
    %1072 = vmatpush1.msra.mxu0 %v84
    %1073 = vmatprep.subr.mxu0 0.0
    %1074 = vmatpush1.msra.mxu0 %v87
    %1075 = vmatprep.subr.mxu0 0.0
    %1076 = vmatpush1.msra.mxu0 %v90
    %1077 = vmatprep.subr.mxu0 0.0
    %1078 = vmatpush1.msra.mxu0 %v93
    %1079 = vmatprep.subr.mxu0 0.0
    %1080 = vmatpush1.msra.mxu0 0.0
    %1081 = vmatprep.subr.mxu0 0.0
    %1082 = vmatpush1.msra.mxu0 0.0
    %1083 = vmatprep.subr.mxu0 0.0
    %1084 = vmatpush1.msra.mxu0 0.0
    %1085 = vmatprep.subr.mxu0 0.0
    %1086 = vmatpush1.msra.mxu0 0.0
    %1087 = vmatprep.subr.mxu0 0.0
    %1088 = vmatpush1.msra.mxu0 0.0
    %1089 = vmatprep.subr.mxu0 0.0
    %1090 = vmatpush1.msra.mxu0 0.0
    %1091 = vmatprep.subr.mxu0 0.0
    %1092 = vmatpush1.msra.mxu0 0.0
    %1093 = vmatprep.subr.mxu0 0.0
    %1094 = vmatpush1.msra.mxu0 0.0
    %1095 = vmatprep.subr.mxu0 0.0
    %1096 = vmatpush1.msra.mxu0 0.0
    %1097 = vmatprep.subr.mxu0 0.0
    %1098 = vmatpush1.msra.mxu0 0.0
    %1099 = vmatprep.subr.mxu0 0.0
    %1100 = vmatpush1.msra.mxu0 0.0
    %1101 = vmatprep.subr.mxu0 0.0
    %1102 = vmatpush1.msra.mxu0 0.0
    %1103 = vmatprep.subr.mxu0 0.0
    %1104 = vmatpush1.msra.mxu0 0.0
    %1105 = vmatprep.subr.mxu0 0.0
    %1106 = vmatpush1.msra.mxu0 0.0
    %1107 = vmatprep.subr.mxu0 0.0
    %1108 = vmatpush1.msra.mxu0 0.0
    %1109 = vmatprep.subr.mxu0 0.0
    %1110 = vmatpush1.msra.mxu0 0.0
    %1111 = vmatprep.mubr.f32.mxu0 0.0
    %1112 = vmatmul.mubr.f32.gmra.mrb[0].mxu0 %v969
    %v1113 = vpop.f32.mrb[0].mxu0
    %v1114 = vadd.f32 0.0, %v1113
    %v1115 = vpop.f32.mrb[0].mxu0
    %1116 = vdwg.mxu0
    %v1117 = vadd.f32 %v971, %v1043
    %v1118 = vxor.u32 %v1117, 2147483648
    %v1119 = vmul.f32 %v1118, 1.442695
    %v1120 = vpow.pop %v1119
    %v1121 = vadd.f32 %v1120, 1.0
    %v1122 = vrcp.pop %v1121
    %v1123 = vmul.f32 1.0, %v1122
    %v1124 = vadd.f32 %v972, %v1045
    %v1125 = vtanh.pop %v1124
    %v1126 = vadd.f32 %v975, %v1114
    %v1127 = vxor.u32 %v1126, 2147483648
    %v1128 = vmul.f32 %v1127, 1.442695
    %v1129 = vpow.pop %v1128
    %v1130 = vadd.f32 %v1129, 1.0
    %v1131 = vrcp.pop %v1130
    %v1132 = vmul.f32 1.0, %v1131
    %v1133 = vmul.f32 %v1123, %v973
    %v1134 = vsub.f32 1.0, %v1133
    %v1135 = vmul.f32 %v1134, %v967
    %v1136 = vmul.f32 %v1133, %v1125
    %v1137 = vadd.f32 %v1135, %v1136
    %v1138 = vsub.f32 1.0, %v1123
    %v1139 = vmul.f32 %v1138, %v967
    %v1140 = vmul.f32 %v1123, %v974
    %v1141 = vmul.f32 %v1140, %v1125
    %v1142 = vadd.f32 %v1139, %v1141
    %v1143 = vtanh.pop %v1137
    %v1144 = vmul.f32 %v1132, %v1143
    %s1145 = scalar_lea.vmem [#allocation3], 240
    %v1146 = vld [vmem:[%s1145] sm:$0xff]
    %v1147 = vld [vmem:[%s1145 + $0x8] sm:$0xff]
    %v1148 = vld [vmem:[%s1145 + $0x10] sm:$0xff]
    %v1149 = vld [vmem:[%s1145 + $0x18] sm:$0xff]
    %v1150 = vld [vmem:[%s1145 + $0x20] sm:$0xff]
    %1151 = vmatprep.subr.mxu0 %v47
    %1152 = vmatpush1.msra.mxu0 %v46
    %1153 = vmatprep.subr.mxu0 %v50
    %1154 = vmatpush1.msra.mxu0 %v49
    %1155 = vmatprep.subr.mxu0 %v53
    %1156 = vmatpush1.msra.mxu0 %v52
    %1157 = vmatprep.subr.mxu0 %v56
    %1158 = vmatpush1.msra.mxu0 %v55
    %1159 = vmatprep.subr.mxu0 %v59
    %1160 = vmatpush1.msra.mxu0 %v58
    %1161 = vmatprep.subr.mxu0 %v62
    %1162 = vmatpush1.msra.mxu0 %v61
    %1163 = vmatprep.subr.mxu0 %v65
    %1164 = vmatpush1.msra.mxu0 %v64
    %1165 = vmatprep.subr.mxu0 %v68
    %1166 = vmatpush1.msra.mxu0 %v67
    %1167 = vmatprep.subr.mxu0 %v71
    %1168 = vmatpush1.msra.mxu0 %v70
    %1169 = vmatprep.subr.mxu0 %v74
    %1170 = vmatpush1.msra.mxu0 %v73
    %1171 = vmatprep.subr.mxu0 %v77
    %1172 = vmatpush1.msra.mxu0 %v76
    %1173 = vmatprep.subr.mxu0 %v80
    %1174 = vmatpush1.msra.mxu0 %v79
    %1175 = vmatprep.subr.mxu0 %v83
    %1176 = vmatpush1.msra.mxu0 %v82
    %1177 = vmatprep.subr.mxu0 %v86
    %1178 = vmatpush1.msra.mxu0 %v85
    %1179 = vmatprep.subr.mxu0 %v89
    %1180 = vmatpush1.msra.mxu0 %v88
    %1181 = vmatprep.subr.mxu0 %v92
    %1182 = vmatpush1.msra.mxu0 %v91
    %1183 = vmatprep.subr.mxu0 0.0
    %1184 = vmatpush1.msra.mxu0 0.0
    %1185 = vmatprep.subr.mxu0 0.0
    %1186 = vmatpush1.msra.mxu0 0.0
    %1187 = vmatprep.subr.mxu0 0.0
    %1188 = vmatpush1.msra.mxu0 0.0
    %1189 = vmatprep.subr.mxu0 0.0
    %1190 = vmatpush1.msra.mxu0 0.0
    %1191 = vmatprep.subr.mxu0 0.0
    %1192 = vmatpush1.msra.mxu0 0.0
    %1193 = vmatprep.subr.mxu0 0.0
    %1194 = vmatpush1.msra.mxu0 0.0
    %1195 = vmatprep.subr.mxu0 0.0
    %1196 = vmatpush1.msra.mxu0 0.0
    %1197 = vmatprep.subr.mxu0 0.0
    %1198 = vmatpush1.msra.mxu0 0.0
    %1199 = vmatprep.subr.mxu0 0.0
    %1200 = vmatpush1.msra.mxu0 0.0
    %1201 = vmatprep.subr.mxu0 0.0
    %1202 = vmatpush1.msra.mxu0 0.0
    %1203 = vmatprep.subr.mxu0 0.0
    %1204 = vmatpush1.msra.mxu0 0.0
    %1205 = vmatprep.subr.mxu0 0.0
    %1206 = vmatpush1.msra.mxu0 0.0
    %1207 = vmatprep.subr.mxu0 0.0
    %1208 = vmatpush1.msra.mxu0 0.0
    %1209 = vmatprep.subr.mxu0 0.0
    %1210 = vmatpush1.msra.mxu0 0.0
    %1211 = vmatprep.subr.mxu0 0.0
    %1212 = vmatpush1.msra.mxu0 0.0
    %1213 = vmatprep.subr.mxu0 0.0
    %1214 = vmatpush1.msra.mxu0 0.0
    %1215 = vmatprep.mubr.f32.mxu0 0.0
    %1216 = vmatmul.mubr.f32.gmra.mrb[0].mxu0 %v1144
    %v1217 = vpop.f32.mrb[0].mxu0
    %v1218 = vadd.f32 0.0, %v1217
    %v1219 = vpop.f32.mrb[0].mxu0
    %v1220 = vadd.f32 0.0, %v1219
    %1221 = vdwg.mxu0
    %1222 = vmatprep.subr.mxu0 0.0
    %1223 = vmatpush1.msra.mxu0 %v48
    %1224 = vmatprep.subr.mxu0 0.0
    %1225 = vmatpush1.msra.mxu0 %v51
    %1226 = vmatprep.subr.mxu0 0.0
    %1227 = vmatpush1.msra.mxu0 %v54
    %1228 = vmatprep.subr.mxu0 0.0
    %1229 = vmatpush1.msra.mxu0 %v57
    %1230 = vmatprep.subr.mxu0 0.0
    %1231 = vmatpush1.msra.mxu0 %v60
    %1232 = vmatprep.subr.mxu0 0.0
    %1233 = vmatpush1.msra.mxu0 %v63
    %1234 = vmatprep.subr.mxu0 0.0
    %1235 = vmatpush1.msra.mxu0 %v66
    %1236 = vmatprep.subr.mxu0 0.0
    %1237 = vmatpush1.msra.mxu0 %v69
    %1238 = vmatprep.subr.mxu0 0.0
    %1239 = vmatpush1.msra.mxu0 %v72
    %1240 = vmatprep.subr.mxu0 0.0
    %1241 = vmatpush1.msra.mxu0 %v75
    %1242 = vmatprep.subr.mxu0 0.0
    %1243 = vmatpush1.msra.mxu0 %v78
    %1244 = vmatprep.subr.mxu0 0.0
    %1245 = vmatpush1.msra.mxu0 %v81
    %1246 = vmatprep.subr.mxu0 0.0
    %1247 = vmatpush1.msra.mxu0 %v84
    %1248 = vmatprep.subr.mxu0 0.0
    %1249 = vmatpush1.msra.mxu0 %v87
    %1250 = vmatprep.subr.mxu0 0.0
    %1251 = vmatpush1.msra.mxu0 %v90
    %1252 = vmatprep.subr.mxu0 0.0
    %1253 = vmatpush1.msra.mxu0 %v93
    %1254 = vmatprep.subr.mxu0 0.0
    %1255 = vmatpush1.msra.mxu0 0.0
    %1256 = vmatprep.subr.mxu0 0.0
    %1257 = vmatpush1.msra.mxu0 0.0
    %1258 = vmatprep.subr.mxu0 0.0
    %1259 = vmatpush1.msra.mxu0 0.0
    %1260 = vmatprep.subr.mxu0 0.0
    %1261 = vmatpush1.msra.mxu0 0.0
    %1262 = vmatprep.subr.mxu0 0.0
    %1263 = vmatpush1.msra.mxu0 0.0
    %1264 = vmatprep.subr.mxu0 0.0
    %1265 = vmatpush1.msra.mxu0 0.0
    %1266 = vmatprep.subr.mxu0 0.0
    %1267 = vmatpush1.msra.mxu0 0.0
    %1268 = vmatprep.subr.mxu0 0.0
    %1269 = vmatpush1.msra.mxu0 0.0
    %1270 = vmatprep.subr.mxu0 0.0
    %1271 = vmatpush1.msra.mxu0 0.0
    %1272 = vmatprep.subr.mxu0 0.0
    %1273 = vmatpush1.msra.mxu0 0.0
    %1274 = vmatprep.subr.mxu0 0.0
    %1275 = vmatpush1.msra.mxu0 0.0
    %1276 = vmatprep.subr.mxu0 0.0
    %1277 = vmatpush1.msra.mxu0 0.0
    %1278 = vmatprep.subr.mxu0 0.0
    %1279 = vmatpush1.msra.mxu0 0.0
    %1280 = vmatprep.subr.mxu0 0.0
    %1281 = vmatpush1.msra.mxu0 0.0
    %1282 = vmatprep.subr.mxu0 0.0
    %1283 = vmatpush1.msra.mxu0 0.0
    %1284 = vmatprep.subr.mxu0 0.0
    %1285 = vmatpush1.msra.mxu0 0.0
    %1286 = vmatprep.mubr.f32.mxu0 0.0
    %1287 = vmatmul.mubr.f32.gmra.mrb[0].mxu0 %v1144
    %v1288 = vpop.f32.mrb[0].mxu0
    %v1289 = vadd.f32 0.0, %v1288
    %v1290 = vpop.f32.mrb[0].mxu0
    %1291 = vdwg.mxu0
    %v1292 = vadd.f32 %v1146, %v1218
    %v1293 = vxor.u32 %v1292, 2147483648
    %v1294 = vmul.f32 %v1293, 1.442695
    %v1295 = vpow.pop %v1294
    %v1296 = vadd.f32 %v1295, 1.0
    %v1297 = vrcp.pop %v1296
    %v1298 = vmul.f32 1.0, %v1297
    %v1299 = vadd.f32 %v1147, %v1220
    %v1300 = vtanh.pop %v1299
    %v1301 = vadd.f32 %v1150, %v1289
    %v1302 = vxor.u32 %v1301, 2147483648
    %v1303 = vmul.f32 %v1302, 1.442695
    %v1304 = vpow.pop %v1303
    %v1305 = vadd.f32 %v1304, 1.0
    %v1306 = vrcp.pop %v1305
    %v1307 = vmul.f32 1.0, %v1306
    %v1308 = vmul.f32 %v1298, %v1148
    %v1309 = vsub.f32 1.0, %v1308
    %v1310 = vmul.f32 %v1309, %v1142
    %v1311 = vmul.f32 %v1308, %v1300
    %v1312 = vadd.f32 %v1310, %v1311
    %v1313 = vsub.f32 1.0, %v1298
    %v1314 = vmul.f32 %v1313, %v1142
    %v1315 = vmul.f32 %v1298, %v1149
    %v1316 = vmul.f32 %v1315, %v1300
    %v1317 = vadd.f32 %v1314, %v1316
    %v1318 = vtanh.pop %v1312
    %v1319 = vmul.f32 %v1307, %v1318
    %s1320 = scalar_lea.vmem [#allocation3], 280
    %v1321 = vld [vmem:[%s1320] sm:$0xff]
    %v1322 = vld [vmem:[%s1320 + $0x8] sm:$0xff]
    %v1323 = vld [vmem:[%s1320 + $0x10] sm:$0xff]
    %v1324 = vld [vmem:[%s1320 + $0x18] sm:$0xff]
    %v1325 = vld [vmem:[%s1320 + $0x20] sm:$0xff]
    %1326 = vmatprep.subr.mxu0 %v47
    %1327 = vmatpush1.msra.mxu0 %v46
    %1328 = vmatprep.subr.mxu0 %v50
    %1329 = vmatpush1.msra.mxu0 %v49
    %1330 = vmatprep.subr.mxu0 %v53
    %1331 = vmatpush1.msra.mxu0 %v52
    %1332 = vmatprep.subr.mxu0 %v56
    %1333 = vmatpush1.msra.mxu0 %v55
    %1334 = vmatprep.subr.mxu0 %v59
    %1335 = vmatpush1.msra.mxu0 %v58
    %1336 = vmatprep.subr.mxu0 %v62
    %1337 = vmatpush1.msra.mxu0 %v61
    %1338 = vmatprep.subr.mxu0 %v65
    %1339 = vmatpush1.msra.mxu0 %v64
    %1340 = vmatprep.subr.mxu0 %v68
    %1341 = vmatpush1.msra.mxu0 %v67
    %1342 = vmatprep.subr.mxu0 %v71
    %1343 = vmatpush1.msra.mxu0 %v70
    %1344 = vmatprep.subr.mxu0 %v74
    %1345 = vmatpush1.msra.mxu0 %v73
    %1346 = vmatprep.subr.mxu0 %v77
    %1347 = vmatpush1.msra.mxu0 %v76
    %1348 = vmatprep.subr.mxu0 %v80
    %1349 = vmatpush1.msra.mxu0 %v79
    %1350 = vmatprep.subr.mxu0 %v83
    %1351 = vmatpush1.msra.mxu0 %v82
    %1352 = vmatprep.subr.mxu0 %v86
    %1353 = vmatpush1.msra.mxu0 %v85
    %1354 = vmatprep.subr.mxu0 %v89
    %1355 = vmatpush1.msra.mxu0 %v88
    %1356 = vmatprep.subr.mxu0 %v92
    %1357 = vmatpush1.msra.mxu0 %v91
    %1358 = vmatprep.subr.mxu0 0.0
    %1359 = vmatpush1.msra.mxu0 0.0
    %1360 = vmatprep.subr.mxu0 0.0
    %1361 = vmatpush1.msra.mxu0 0.0
    %1362 = vmatprep.subr.mxu0 0.0
    %1363 = vmatpush1.msra.mxu0 0.0
    %1364 = vmatprep.subr.mxu0 0.0
    %1365 = vmatpush1.msra.mxu0 0.0
    %1366 = vmatprep.subr.mxu0 0.0
    %1367 = vmatpush1.msra.mxu0 0.0
    %1368 = vmatprep.subr.mxu0 0.0
    %1369 = vmatpush1.msra.mxu0 0.0
    %1370 = vmatprep.subr.mxu0 0.0
    %1371 = vmatpush1.msra.mxu0 0.0
    %1372 = vmatprep.subr.mxu0 0.0
    %1373 = vmatpush1.msra.mxu0 0.0
    %1374 = vmatprep.subr.mxu0 0.0
    %1375 = vmatpush1.msra.mxu0 0.0
    %1376 = vmatprep.subr.mxu0 0.0
    %1377 = vmatpush1.msra.mxu0 0.0
    %1378 = vmatprep.subr.mxu0 0.0
    %1379 = vmatpush1.msra.mxu0 0.0
    %1380 = vmatprep.subr.mxu0 0.0
    %1381 = vmatpush1.msra.mxu0 0.0
    %1382 = vmatprep.subr.mxu0 0.0
    %1383 = vmatpush1.msra.mxu0 0.0
    %1384 = vmatprep.subr.mxu0 0.0
    %1385 = vmatpush1.msra.mxu0 0.0
    %1386 = vmatprep.subr.mxu0 0.0
    %1387 = vmatpush1.msra.mxu0 0.0
    %1388 = vmatprep.subr.mxu0 0.0
    %1389 = vmatpush1.msra.mxu0 0.0
    %1390 = vmatprep.mubr.f32.mxu0 0.0
    %1391 = vmatmul.mubr.f32.gmra.mrb[0].mxu0 %v1319
    %v1392 = vpop.f32.mrb[0].mxu0
    %v1393 = vadd.f32 0.0, %v1392
    %v1394 = vpop.f32.mrb[0].mxu0
    %v1395 = vadd.f32 0.0, %v1394
    %1396 = vdwg.mxu0
    %1397 = vmatprep.subr.mxu0 0.0
    %1398 = vmatpush1.msra.mxu0 %v48
    %1399 = vmatprep.subr.mxu0 0.0
    %1400 = vmatpush1.msra.mxu0 %v51
    %1401 = vmatprep.subr.mxu0 0.0
    %1402 = vmatpush1.msra.mxu0 %v54
    %1403 = vmatprep.subr.mxu0 0.0
    %1404 = vmatpush1.msra.mxu0 %v57
    %1405 = vmatprep.subr.mxu0 0.0
    %1406 = vmatpush1.msra.mxu0 %v60
    %1407 = vmatprep.subr.mxu0 0.0
    %1408 = vmatpush1.msra.mxu0 %v63
    %1409 = vmatprep.subr.mxu0 0.0
    %1410 = vmatpush1.msra.mxu0 %v66
    %1411 = vmatprep.subr.mxu0 0.0
    %1412 = vmatpush1.msra.mxu0 %v69
    %1413 = vmatprep.subr.mxu0 0.0
    %1414 = vmatpush1.msra.mxu0 %v72
    %1415 = vmatprep.subr.mxu0 0.0
    %1416 = vmatpush1.msra.mxu0 %v75
    %1417 = vmatprep.subr.mxu0 0.0
    %1418 = vmatpush1.msra.mxu0 %v78
    %1419 = vmatprep.subr.mxu0 0.0
    %1420 = vmatpush1.msra.mxu0 %v81
    %1421 = vmatprep.subr.mxu0 0.0
    %1422 = vmatpush1.msra.mxu0 %v84
    %1423 = vmatprep.subr.mxu0 0.0
    %1424 = vmatpush1.msra.mxu0 %v87
    %1425 = vmatprep.subr.mxu0 0.0
    %1426 = vmatpush1.msra.mxu0 %v90
    %1427 = vmatprep.subr.mxu0 0.0
    %1428 = vmatpush1.msra.mxu0 %v93
    %1429 = vmatprep.subr.mxu0 0.0
    %1430 = vmatpush1.msra.mxu0 0.0
    %1431 = vmatprep.subr.mxu0 0.0
    %1432 = vmatpush1.msra.mxu0 0.0
    %1433 = vmatprep.subr.mxu0 0.0
    %1434 = vmatpush1.msra.mxu0 0.0
    %1435 = vmatprep.subr.mxu0 0.0
    %1436 = vmatpush1.msra.mxu0 0.0
    %1437 = vmatprep.subr.mxu0 0.0
    %1438 = vmatpush1.msra.mxu0 0.0
    %1439 = vmatprep.subr.mxu0 0.0
    %1440 = vmatpush1.msra.mxu0 0.0
    %1441 = vmatprep.subr.mxu0 0.0
    %1442 = vmatpush1.msra.mxu0 0.0
    %1443 = vmatprep.subr.mxu0 0.0
    %1444 = vmatpush1.msra.mxu0 0.0
    %1445 = vmatprep.subr.mxu0 0.0
    %1446 = vmatpush1.msra.mxu0 0.0
    %1447 = vmatprep.subr.mxu0 0.0
    %1448 = vmatpush1.msra.mxu0 0.0
    %1449 = vmatprep.subr.mxu0 0.0
    %1450 = vmatpush1.msra.mxu0 0.0
    %1451 = vmatprep.subr.mxu0 0.0
    %1452 = vmatpush1.msra.mxu0 0.0
    %1453 = vmatprep.subr.mxu0 0.0
    %1454 = vmatpush1.msra.mxu0 0.0
    %1455 = vmatprep.subr.mxu0 0.0
    %1456 = vmatpush1.msra.mxu0 0.0
    %1457 = vmatprep.subr.mxu0 0.0
    %1458 = vmatpush1.msra.mxu0 0.0
    %1459 = vmatprep.subr.mxu0 0.0
    %1460 = vmatpush1.msra.mxu0 0.0
    %1461 = vmatprep.mubr.f32.mxu0 0.0
    %1462 = vmatmul.mubr.f32.gmra.mrb[0].mxu0 %v1319
    %v1463 = vpop.f32.mrb[0].mxu0
    %v1464 = vadd.f32 0.0, %v1463
    %v1465 = vpop.f32.mrb[0].mxu0
    %1466 = vdwg.mxu0
    %v1467 = vadd.f32 %v1321, %v1393
    %v1468 = vxor.u32 %v1467, 2147483648
    %v1469 = vmul.f32 %v1468, 1.442695
    %v1470 = vpow.pop %v1469
    %v1471 = vadd.f32 %v1470, 1.0
    %v1472 = vrcp.pop %v1471
    %v1473 = vmul.f32 1.0, %v1472
    %v1474 = vadd.f32 %v1322, %v1395
    %v1475 = vtanh.pop %v1474
    %v1476 = vadd.f32 %v1325, %v1464
    %v1477 = vxor.u32 %v1476, 2147483648
    %v1478 = vmul.f32 %v1477, 1.442695
    %v1479 = vpow.pop %v1478
    %v1480 = vadd.f32 %v1479, 1.0
    %v1481 = vrcp.pop %v1480
    %v1482 = vmul.f32 1.0, %v1481
    %v1483 = vmul.f32 %v1473, %v1323
    %v1484 = vsub.f32 1.0, %v1483
    %v1485 = vmul.f32 %v1484, %v1317
    %v1486 = vmul.f32 %v1483, %v1475
    %v1487 = vadd.f32 %v1485, %v1486
    %v1488 = vsub.f32 1.0, %v1473
    %v1489 = vmul.f32 %v1488, %v1317
    %v1490 = vmul.f32 %v1473, %v1324
    %v1491 = vmul.f32 %v1490, %v1475
    %v1492 = vadd.f32 %v1489, %v1491
    %v1493 = vtanh.pop %v1487
    %v1494 = vmul.f32 %v1482, %v1493
    %1495 = vst [vmem:[#allocation8] sm:$0xff] %v1494
    %1496 = vst [vmem:[#allocation2] sm:$0xff] %v1492
    // Predicated region
    $region22: #{tpu_custom_call.1} parent=1 // pred_check
      _
    $region23: #{tpu_custom_call.1} parent=1 // pred_check_branch
      %1498 = sbr.rel (0) target = $region25
    $region24: #{tpu_custom_call.1} parent=1 // pred_region
      %s1500 = ssub.s32 128, 128
      %1501 = vsyncadd [#allocation5], %s1500
      %s1503 = sshll.u32 [#allocation8], 4
      %s1504 = int_to_ptr.vmem [resolvable:$true] %s1503
      %1506 = dma.vmem_to_hbm [thread:$0]  %s1504, 128, %s2, [#allocation5]
    $region25: #{tpu_custom_call.1} parent=1 // pred_fallthru
      _
    // Predicated region
    $region26: #{tpu_custom_call.1} parent=1 // pred_check
      _
    $region27: #{tpu_custom_call.1} parent=1 // pred_check_branch
      %1508 = sbr.rel (0) target = $region29
    $region28: #{tpu_custom_call.1} parent=1 // pred_region
      %1509 = dma.done [#allocation5], 128
    $region29: #{tpu_custom_call.1} parent=1 // pred_fallthru
      _
    %1510 = vsyncpa [#allocation4], 1
    %1511 = vsyncpa [#allocation7], 1
    %1512 = vsyncpa [#allocation5], 1

</llo_original>
